<compile_context>
chip_gen: v7x
topology: tpu7x:2x2x1
jax: 0.10.0
libtpu: 0.0.40
codegen_flags: <defaults>
</compile_context>

<pallas_src>
import jax
import jax.numpy as jnp
from jax.experimental import pallas as pl
from jax.experimental.pallas import tpu as pltpu

BN_EPS = 1e-5


# ---------------------------------------------------------------------------
# Fused Pallas kernel: one grid step processes G graphs (G*N rows).
# ---------------------------------------------------------------------------
def cell_kernel(abd_ref, h_ref, w_ref, s_ref, wc_ref, sc_ref, out_ref):
    A = abd_ref[...]                           # (GN, GN) bf16, block-diag adjacency
    h_f32 = h_ref[...]                         # (GN, D)  f32
    h_bf = h_f32.astype(jnp.bfloat16)

    def op_module(x_bf, i):
        # folded Linear + BatchNorm(eval) + ReLU:  relu(x @ W'_i + shift'_i)
        y = jnp.dot(x_bf, w_ref[i], preferred_element_type=jnp.float32)
        return jnp.maximum(y + s_ref[i], 0.0)

    # node 1:  op('gcn', states[0])
    agg0 = jnp.dot(A, h_bf, preferred_element_type=jnp.float32)
    st1 = op_module(agg0.astype(jnp.bfloat16), 0)
    st1_bf = st1.astype(jnp.bfloat16)

    # node 2:  op('identity', states[0]) + op('gcn', states[1])
    e20 = op_module(h_bf, 1)
    agg1 = jnp.dot(A, st1_bf, preferred_element_type=jnp.float32)
    e21 = op_module(agg1.astype(jnp.bfloat16), 2)
    st2 = e20 + e21

    # concat([st1, st2]) @ Wc  ==  st1 @ Wc[:D] + st2 @ Wc[D:]  (no concatenate)
    nh = (jnp.dot(st1_bf, wc_ref[0], preferred_element_type=jnp.float32)
          + jnp.dot(st2.astype(jnp.bfloat16), wc_ref[1],
                    preferred_element_type=jnp.float32)
          + sc_ref[...])
    # cell BatchNorm folded into wc/sc; ReLU; dropout(eval) = identity; residual
    nh = jnp.maximum(nh, 0.0)
    out_ref[...] = h_f32 + nh


def _build_block_diag_adj(adj, G):
    """[B, N, N] -> [(B//G)*G*N, G*N] block-diagonal adjacency per group."""
    B, N, _ = adj.shape
    ng = B // G
    adj_g = adj.reshape(ng, G, N, N)
    eye_g = jnp.eye(G, dtype=adj.dtype)
    a_bd = jnp.einsum("bgij,gh->bgihj", adj_g, eye_g)
    return a_bd.reshape(ng * G * N, G * N)


def cell_forward(adj, h, packed, *, graphs_per_step=16):
    """adj: [B, N, N] f32, h: [B, N, D] f32;
    packed = (ops_w bf16 [3,D,D], ops_s f32 [3,1,D], wc_w bf16 [2,D,D], wc_s f32 [1,D])."""
    B, N, D = h.shape
    ops_w, ops_s, wc_w, wc_s = packed
    G = graphs_per_step
    assert B % G == 0, "batch must be divisible by graphs_per_step"
    GN = G * N
    steps = B // G

    a_bd = _build_block_diag_adj(adj, G).astype(jnp.bfloat16)   # [(B//G)*GN, GN]
    h2d = h.reshape(B * N, D)                                    # [B*N, D] f32

    flops = steps * (2 * 2 * GN * GN * D        # two block-diag aggregations
                     + 5 * 2 * GN * D * D)      # 3 op matmuls + 2 concat halves
    bytes_accessed = (a_bd.size * 2 + h2d.size * 4 + B * N * D * 4
                      + ops_w.size * 2 + ops_s.size * 4
                      + wc_w.size * 2 + wc_s.size * 4)

    out2d = pl.pallas_call(
        cell_kernel,
        out_shape=jax.ShapeDtypeStruct((B * N, D), jnp.float32),
        grid=(steps,),
        in_specs=[
            pl.BlockSpec((GN, GN), lambda b: (b, 0)),        # block-diag adj, per group
            pl.BlockSpec((GN, D), lambda b: (b, 0)),         # h rows, per group
            pl.BlockSpec(ops_w.shape, lambda b: (0, 0, 0)),  # op weights, resident
            pl.BlockSpec(ops_s.shape, lambda b: (0, 0, 0)),  # op shifts, resident
            pl.BlockSpec(wc_w.shape, lambda b: (0, 0, 0)),   # concat W halves
            pl.BlockSpec(wc_s.shape, lambda b: (0, 0)),      # concat shift
        ],
        out_specs=pl.BlockSpec((GN, D), lambda b: (b, 0)),
        compiler_params=pltpu.CompilerParams(
            dimension_semantics=("parallel",)),
        cost_estimate=pl.CostEstimate(flops=flops, transcendentals=0,
                                      bytes_accessed=bytes_accessed),
    )(a_bd, h2d, ops_w, ops_s, wc_w, wc_s)

    return out2d.reshape(B, N, D)


# ---------------------------------------------------------------------------
# Parameter construction (deterministic), host-side folding/packing,
# and a pure-JAX reference.
# ---------------------------------------------------------------------------
def make_params(key, D):
    keys = jax.random.split(key, 32)
    k = iter(keys)

    def linear(din, dout):
        w = jax.random.normal(next(k), (din, dout), jnp.float32) * 0.1  # x@W layout
        b = jax.random.normal(next(k), (1, dout), jnp.float32) * 0.1
        return w, b

    def bn(d):
        gamma = 1.0 + 0.1 * jax.random.normal(next(k), (d,), jnp.float32)
        beta = 0.1 * jax.random.normal(next(k), (d,), jnp.float32)
        rmean = 0.1 * jax.random.normal(next(k), (d,), jnp.float32)
        rvar = 1.0 + 0.1 * jax.random.uniform(next(k), (d,), jnp.float32)
        s = gamma / jnp.sqrt(rvar + BN_EPS)
        t = beta - rmean * s
        return s.reshape(1, d), t.reshape(1, d)

    ops = []
    for _ in range(3):              # three OpModules (one per genotype edge)
        w, b = linear(D, D)
        s, t = bn(D)
        ops.append((w, b, s, t))
    wc, bc = linear(2 * D, D)       # concat Linear: 2D -> D
    sc, tc = bn(D)                  # cell BatchNorm

    ref = {"ops": ops, "wc": wc, "bc": bc, "sc": sc, "tc": tc}

    # --- fold bias + eval-mode BN into weight / shift (exact in f32) --------
    def fold(w, b, s, t):
        return w * s, b * s + t     # W' = W * s (cols), shift' = b*s + t

    folded = [fold(*op) for op in ops]
    ops_w = jnp.stack([w for w, _ in folded]).astype(jnp.bfloat16)   # [3, D, D]
    ops_s = jnp.stack([sh for _, sh in folded])                      # [3, 1, D] f32

    wcf, shc = fold(wc, bc, sc, tc)                                  # [2D, D], [1, D]
    wc_w = jnp.stack([wcf[:D], wcf[D:]]).astype(jnp.bfloat16)        # [2, D, D]
    wc_s = shc                                                       # [1, D] f32

    packed = (ops_w, ops_s, wc_w, wc_s)
    return packed, ref


def cell_reference(adj, h, ref):
    """Pure-JAX f32 reference mirroring the PyTorch Cell.forward (eval mode),
    unfolded parameters, batched over graphs."""
    def op_module(x, w, b, s, t):
        y = x @ w + b
        y = y * s + t
        return jnp.maximum(y, 0.0)

    h_in = h
    (w10, b10, s10, t10), (w20, b20, s20, t20), (w21, b21, s21, t21) = ref["ops"]
    agg0 = jnp.einsum("bij,bjd->bid", adj, h_in)
    st1 = op_module(agg0, w10, b10, s10, t10)
    agg1 = jnp.einsum("bij,bjd->bid", adj, st1)
    st2 = op_module(h_in, w20, b20, s20, t20) + op_module(agg1, w21, b21, s21, t21)
    cat = jnp.concatenate([st1, st2], axis=-1)
    nh = cat @ ref["wc"] + ref["bc"]
    nh = nh * ref["sc"] + ref["tc"]
    nh = jnp.maximum(nh, 0.0)
    return h_in + nh


# ---------------------------------------------------------------------------
if __name__ == "__main__":
    B = 32    # number of graphs
    N = 16    # nodes per graph
    D = 32    # args.feature_dim
    G = 16    # graphs per grid step -> G*N = 256 rows/step, grid = (2,)

    key = jax.random.PRNGKey(0)
    k_adj, k_h, k_par = jax.random.split(key, 3)

    # dense adjacency (row-normalized-ish, deterministic) and node features
    adj = (jax.random.uniform(k_adj, (B, N, N), jnp.float32) < 0.3).astype(jnp.float32)
    adj = adj / (adj.sum(axis=-1, keepdims=True) + 1.0)
    h = jax.random.normal(k_h, (B, N, D), jnp.float32)

    packed, ref = make_params(k_par, D)

    out = cell_forward(adj, h, packed, graphs_per_step=G)
    out = jax.block_until_ready(out)

    expected = cell_reference(adj, h, ref)
    assert out.shape == (B, N, D) and out.dtype == jnp.float32
    # bf16 MXU operands with f32 accumulation -> relaxed tolerance vs f32 reference
    assert jnp.allclose(out, expected, atol=5e-2, rtol=5e-2), "mismatch vs reference"

    print("KERNEL_OK")
</pallas_src>

<mosaic_0001>
module attributes {stable_mosaic.version = 11 : i64} {
  func.func @cell_kernel(%arg0: i32, %arg1: memref<256x256xbf16, #tpu.memory_space<vmem>>, %arg2: memref<256x32xf32, #tpu.memory_space<vmem>>, %arg3: memref<3x32x32xbf16, #tpu.memory_space<vmem>>, %arg4: memref<3x1x32xf32, #tpu.memory_space<vmem>>, %arg5: memref<2x32x32xbf16, #tpu.memory_space<vmem>>, %arg6: memref<1x32xf32, #tpu.memory_space<vmem>>, %arg7: memref<256x32xf32, #tpu.memory_space<vmem>>) attributes {dimension_semantics = [#tpu.dimension_semantics<parallel>], iteration_bounds = array<i64: 2>, scalar_prefetch = 0 : i64, scratch_operands = 0 : i64, tpu.core_type = #tpu.core_type<tc>, window_params = [{transform_indices = @transform_0, window_bounds = array<i64: 256, 256>}, {transform_indices = @transform_1, window_bounds = array<i64: 256, 32>}, {pipeline_mode = #tpu.pipeline_mode<synchronous>, transform_indices = @transform_2, window_bounds = array<i64: 3, 32, 32>}, {pipeline_mode = #tpu.pipeline_mode<synchronous>, transform_indices = @transform_3, window_bounds = array<i64: 3, 1, 32>}, {pipeline_mode = #tpu.pipeline_mode<synchronous>, transform_indices = @transform_4, window_bounds = array<i64: 2, 32, 32>}, {pipeline_mode = #tpu.pipeline_mode<synchronous>, transform_indices = @transform_5, window_bounds = array<i64: 1, 32>}, {transform_indices = @transform_6, window_bounds = array<i64: 256, 32>}]} {
    %c0 = arith.constant 0 : index
    %c0_0 = arith.constant 0 : index
    %0 = vector.load %arg1[%c0, %c0_0] : memref<256x256xbf16, #tpu.memory_space<vmem>>, vector<256x256xbf16>
    %c0_1 = arith.constant 0 : index
    %c0_2 = arith.constant 0 : index
    %1 = vector.load %arg2[%c0_1, %c0_2] : memref<256x32xf32, #tpu.memory_space<vmem>>, vector<256x32xf32>
    %2 = arith.truncf %1 : vector<256x32xf32> to vector<256x32xbf16>
    %cst = arith.constant dense<0.000000e+00> : vector<256x32xf32>
    %3 = tpu.matmul %0, %2, %cst {dimension_numbers = #tpu.dot_dimension_numbers<[1], [0], [0], [1], [0, 0, 1, 1], [], []>} : vector<256x256xbf16>, vector<256x32xbf16>, vector<256x32xf32> -> vector<256x32xf32>
    %4 = arith.truncf %3 : vector<256x32xf32> to vector<256x32xbf16>
    %c0_3 = arith.constant 0 : index
    %c0_4 = arith.constant 0 : index
    %c0_5 = arith.constant 0 : index
    %5 = vector.load %arg3[%c0_3, %c0_4, %c0_5] : memref<3x32x32xbf16, #tpu.memory_space<vmem>>, vector<1x32x32xbf16>
    %6 = vector.shape_cast %5 : vector<1x32x32xbf16> to vector<32x32xbf16>
    %cst_6 = arith.constant dense<0.000000e+00> : vector<256x32xf32>
    %7 = tpu.matmul %4, %6, %cst_6 {dimension_numbers = #tpu.dot_dimension_numbers<[1], [0], [0], [1], [0, 0, 1, 1], [], []>} : vector<256x32xbf16>, vector<32x32xbf16>, vector<256x32xf32> -> vector<256x32xf32>
    %c0_7 = arith.constant 0 : index
    %c0_8 = arith.constant 0 : index
    %c0_9 = arith.constant 0 : index
    %8 = vector.load %arg4[%c0_7, %c0_8, %c0_9] : memref<3x1x32xf32, #tpu.memory_space<vmem>>, vector<1x1x32xf32>
    %9 = vector.shape_cast %8 : vector<1x1x32xf32> to vector<1x32xf32>
    %10 = vector.broadcast %9 : vector<1x32xf32> to vector<256x32xf32>
    %11 = arith.addf %7, %10 : vector<256x32xf32>
    %cst_10 = arith.constant 0.000000e+00 : f32
    %12 = vector.broadcast %cst_10 : f32 to vector<256x32xf32>
    %13 = arith.maximumf %11, %12 : vector<256x32xf32>
    %14 = arith.truncf %13 : vector<256x32xf32> to vector<256x32xbf16>
    %c1 = arith.constant 1 : index
    %c0_11 = arith.constant 0 : index
    %c0_12 = arith.constant 0 : index
    %15 = vector.load %arg3[%c1, %c0_11, %c0_12] : memref<3x32x32xbf16, #tpu.memory_space<vmem>>, vector<1x32x32xbf16>
    %16 = vector.shape_cast %15 : vector<1x32x32xbf16> to vector<32x32xbf16>
    %cst_13 = arith.constant dense<0.000000e+00> : vector<256x32xf32>
    %17 = tpu.matmul %2, %16, %cst_13 {dimension_numbers = #tpu.dot_dimension_numbers<[1], [0], [0], [1], [0, 0, 1, 1], [], []>} : vector<256x32xbf16>, vector<32x32xbf16>, vector<256x32xf32> -> vector<256x32xf32>
    %c1_14 = arith.constant 1 : index
    %c0_15 = arith.constant 0 : index
    %c0_16 = arith.constant 0 : index
    %18 = vector.load %arg4[%c1_14, %c0_15, %c0_16] : memref<3x1x32xf32, #tpu.memory_space<vmem>>, vector<1x1x32xf32>
    %19 = vector.shape_cast %18 : vector<1x1x32xf32> to vector<1x32xf32>
    %20 = vector.broadcast %19 : vector<1x32xf32> to vector<256x32xf32>
    %21 = arith.addf %17, %20 : vector<256x32xf32>
    %cst_17 = arith.constant 0.000000e+00 : f32
    %22 = vector.broadcast %cst_17 : f32 to vector<256x32xf32>
    %23 = arith.maximumf %21, %22 : vector<256x32xf32>
    %cst_18 = arith.constant dense<0.000000e+00> : vector<256x32xf32>
    %24 = tpu.matmul %0, %14, %cst_18 {dimension_numbers = #tpu.dot_dimension_numbers<[1], [0], [0], [1], [0, 0, 1, 1], [], []>} : vector<256x256xbf16>, vector<256x32xbf16>, vector<256x32xf32> -> vector<256x32xf32>
    %25 = arith.truncf %24 : vector<256x32xf32> to vector<256x32xbf16>
    %c2 = arith.constant 2 : index
    %c0_19 = arith.constant 0 : index
    %c0_20 = arith.constant 0 : index
    %26 = vector.load %arg3[%c2, %c0_19, %c0_20] : memref<3x32x32xbf16, #tpu.memory_space<vmem>>, vector<1x32x32xbf16>
    %27 = vector.shape_cast %26 : vector<1x32x32xbf16> to vector<32x32xbf16>
    %cst_21 = arith.constant dense<0.000000e+00> : vector<256x32xf32>
    %28 = tpu.matmul %25, %27, %cst_21 {dimension_numbers = #tpu.dot_dimension_numbers<[1], [0], [0], [1], [0, 0, 1, 1], [], []>} : vector<256x32xbf16>, vector<32x32xbf16>, vector<256x32xf32> -> vector<256x32xf32>
    %c2_22 = arith.constant 2 : index
    %c0_23 = arith.constant 0 : index
    %c0_24 = arith.constant 0 : index
    %29 = vector.load %arg4[%c2_22, %c0_23, %c0_24] : memref<3x1x32xf32, #tpu.memory_space<vmem>>, vector<1x1x32xf32>
    %30 = vector.shape_cast %29 : vector<1x1x32xf32> to vector<1x32xf32>
    %31 = vector.broadcast %30 : vector<1x32xf32> to vector<256x32xf32>
    %32 = arith.addf %28, %31 : vector<256x32xf32>
    %cst_25 = arith.constant 0.000000e+00 : f32
    %33 = vector.broadcast %cst_25 : f32 to vector<256x32xf32>
    %34 = arith.maximumf %32, %33 : vector<256x32xf32>
    %35 = arith.addf %23, %34 : vector<256x32xf32>
    %c0_26 = arith.constant 0 : index
    %c0_27 = arith.constant 0 : index
    %c0_28 = arith.constant 0 : index
    %36 = vector.load %arg5[%c0_26, %c0_27, %c0_28] : memref<2x32x32xbf16, #tpu.memory_space<vmem>>, vector<1x32x32xbf16>
    %37 = vector.shape_cast %36 : vector<1x32x32xbf16> to vector<32x32xbf16>
    %cst_29 = arith.constant dense<0.000000e+00> : vector<256x32xf32>
    %38 = tpu.matmul %14, %37, %cst_29 {dimension_numbers = #tpu.dot_dimension_numbers<[1], [0], [0], [1], [0, 0, 1, 1], [], []>} : vector<256x32xbf16>, vector<32x32xbf16>, vector<256x32xf32> -> vector<256x32xf32>
    %39 = arith.truncf %35 : vector<256x32xf32> to vector<256x32xbf16>
    %c1_30 = arith.constant 1 : index
    %c0_31 = arith.constant 0 : index
    %c0_32 = arith.constant 0 : index
    %40 = vector.load %arg5[%c1_30, %c0_31, %c0_32] : memref<2x32x32xbf16, #tpu.memory_space<vmem>>, vector<1x32x32xbf16>
    %41 = vector.shape_cast %40 : vector<1x32x32xbf16> to vector<32x32xbf16>
    %cst_33 = arith.constant dense<0.000000e+00> : vector<256x32xf32>
    %42 = tpu.matmul %39, %41, %cst_33 {dimension_numbers = #tpu.dot_dimension_numbers<[1], [0], [0], [1], [0, 0, 1, 1], [], []>} : vector<256x32xbf16>, vector<32x32xbf16>, vector<256x32xf32> -> vector<256x32xf32>
    %43 = arith.addf %38, %42 : vector<256x32xf32>
    %c0_34 = arith.constant 0 : index
    %c0_35 = arith.constant 0 : index
    %44 = vector.load %arg6[%c0_34, %c0_35] : memref<1x32xf32, #tpu.memory_space<vmem>>, vector<1x32xf32>
    %45 = vector.broadcast %44 : vector<1x32xf32> to vector<256x32xf32>
    %46 = arith.addf %43, %45 : vector<256x32xf32>
    %cst_36 = arith.constant 0.000000e+00 : f32
    %47 = vector.broadcast %cst_36 : f32 to vector<256x32xf32>
    %48 = arith.maximumf %46, %47 : vector<256x32xf32>
    %49 = arith.addf %1, %48 : vector<256x32xf32>
    %c0_37 = arith.constant 0 : index
    %c0_38 = arith.constant 0 : index
    %50 = vector.load %arg7[%c0_37, %c0_38] : memref<256x32xf32, #tpu.memory_space<vmem>>, vector<256x32xf32>
    tpu.vector_store %arg7[%c0_37, %c0_38], %49 {strides = array<i32>} : memref<256x32xf32, #tpu.memory_space<vmem>>, vector<256x32xf32>,
    return
  }
  func.func @transform_0(%arg0: i32) -> (i32, i32) {
    %c0_i32 = arith.constant 0 : i32
    %c0_i32_0 = arith.constant 0 : i32
    return %arg0, %c0_i32 : i32, i32
  }
  func.func @transform_1(%arg0: i32) -> (i32, i32) {
    %c0_i32 = arith.constant 0 : i32
    %c0_i32_0 = arith.constant 0 : i32
    return %arg0, %c0_i32 : i32, i32
  }
  func.func @transform_2(%arg0: i32) -> (i32, i32, i32) {
    %c0_i32 = arith.constant 0 : i32
    %c0_i32_0 = arith.constant 0 : i32
    %c0_i32_1 = arith.constant 0 : i32
    %c0_i32_2 = arith.constant 0 : i32
    return %c0_i32, %c0_i32_0, %c0_i32_1 : i32, i32, i32
  }
  func.func @transform_3(%arg0: i32) -> (i32, i32, i32) {
    %c0_i32 = arith.constant 0 : i32
    %c0_i32_0 = arith.constant 0 : i32
    %c0_i32_1 = arith.constant 0 : i32
    %c0_i32_2 = arith.constant 0 : i32
    return %c0_i32, %c0_i32_0, %c0_i32_1 : i32, i32, i32
  }
  func.func @transform_4(%arg0: i32) -> (i32, i32, i32) {
    %c0_i32 = arith.constant 0 : i32
    %c0_i32_0 = arith.constant 0 : i32
    %c0_i32_1 = arith.constant 0 : i32
    %c0_i32_2 = arith.constant 0 : i32
    return %c0_i32, %c0_i32_0, %c0_i32_1 : i32, i32, i32
  }
  func.func @transform_5(%arg0: i32) -> (i32, i32) {
    %c0_i32 = arith.constant 0 : i32
    %c0_i32_0 = arith.constant 0 : i32
    %c0_i32_1 = arith.constant 0 : i32
    return %c0_i32, %c0_i32_0 : i32, i32
  }
  func.func @transform_6(%arg0: i32) -> (i32, i32) {
    %c0_i32 = arith.constant 0 : i32
    %c0_i32_0 = arith.constant 0 : i32
    return %arg0, %c0_i32 : i32, i32
  }
}

</mosaic_0001>

<llo_original>
// kernel: tpu_custom_call.1
$region0: #{tpu_custom_call.1}
  #allocation0 [shape = 'u32[]', space=smem, size = 0x4, offset = 0x4, fixed_abs, tag = 'smem constant byte address 0x4 - core index']
  #allocation1 [shape = 'u32[144,128]{1,0:T(1,128)}', space=vmem, size = 0x12000, scoped, tag = 'internal scratch']
  %s0 = inlined_call_operand.vmem [shape: bf16[512,256], index: 0, kind: input, shape index: {}]
  %s1 = inlined_call_operand.vmem [shape: f32[512,32], index: 1, kind: input, shape index: {}]
  %s2 = inlined_call_operand.vmem [shape: bf16[3,32,32], index: 2, kind: input, shape index: {}]
  %s3 = inlined_call_operand.vmem [shape: f32[3,1,32], index: 3, kind: input, shape index: {}]
  %s4 = inlined_call_operand.vmem [shape: bf16[2,32,32], index: 4, kind: input, shape index: {}]
  %s5 = inlined_call_operand.vmem [shape: f32[1,32], index: 5, kind: input, shape index: {}]
  %s6 = inlined_call_operand.vmem [shape: f32[512,32], index: 6, kind: output, shape index: {}]
  %s7 = sld [smem:[#allocation0]]
  $region57: #{tpu_custom_call.1} parent=0
    _
  %s9 = ssub.s32 1, %s7
  %s10 = scalar_select 0, %s9, %s7
  loop: start=0, step=1, limit=4
  $region2: #{tpu_custom_call.1} parent=0 // loop_pre_header
    _
  $region3: #{tpu_custom_call.1} parent=0 // loop_header
    %s12 = sphi 0, %s16
    %p13 = scmp.ge.s32.totalorder %s12, 4
    %s22 = sphi 0, %s24
    %s25 = sphi 0, %s22
    %s26 = sphi 0, %s25
    %s42 = sphi 0, %s26
    %s48 = sphi 0, %s50
    %s51 = sphi 0, %s48
    %s52 = sphi 0, %s51
    %s68 = sphi 0, %s52
    %s72 = sphi 0, %s72
    %s74 = sphi 0, %s72
    %s75 = sphi 0, %s74
    %s89 = sphi 0, %s75
    %s93 = sphi 0, %s93
    %s95 = sphi 0, %s93
    %s96 = sphi 0, %s95
    %s110 = sphi 0, %s96
    %s114 = sphi 0, %s114
    %s116 = sphi 0, %s114
    %s117 = sphi 0, %s116
    %s131 = sphi 0, %s117
    %s135 = sphi 0, %s135
    %s137 = sphi 0, %s135
    %s138 = sphi 0, %s137
    %s152 = sphi 0, %s138
    %s158 = sphi 0, %s160
    %s161 = sphi 0, %s158
    %s162 = sphi 0, %s161
    %s178 = sphi 0, %s162
  $region4: #{tpu_custom_call.1} parent=0 // loop_header_branch
    %15 = sbr.rel (%p13) target = $region8
  $region5: #{tpu_custom_call.1} parent=0 // loop_body
    %s17 = ssub.s32 %s12, 1
    %s18 = ssub.s32 %s12, 2
    %s19 = sadd.s32 %s12, 1
    %s20 = ssub.s32 %s12, %s19
    %p21 = scmp.eq.s32.totalorder %s20, 0
    %s23 = sadd.s32 %s22, 1
    %s24 = scalar_select %p21, %s22, %s23
    %p27 = pneg %p21
    %p28 = scmp.eq.s32.totalorder %s12, 1
    %p29 = por %p27, %p28
    %p30 = scmp.ne.s32.totalorder %s22, %s25
    %p31 = scmp.eq.s32.totalorder %s12, 0
    %p32 = por %p30, %p31
    %p33 = scmp.ne.s32.totalorder %s22, %s25
    %p34 = scmp.eq.s32.totalorder %s17, 1
    %p35 = por %p33, %p34
    %p36 = scmp.ne.s32.totalorder %s25, %s26
    %p37 = scmp.eq.s32.totalorder %s17, 0
    %p38 = por %p36, %p37
    %p39 = scmp.ne.s32.totalorder %s25, %s26
    %p40 = scmp.eq.s32.totalorder %s18, 1
    %p41 = por %p39, %p40
    %p43 = scmp.ne.s32.totalorder %s26, %s42
    %p44 = scmp.eq.s32.totalorder %s18, 0
    %p45 = por %p43, %p44
    %s46 = ssub.s32 %s12, %s19
    %p47 = scmp.eq.s32.totalorder %s46, 0
    %s49 = sadd.s32 %s48, 1
    %s50 = scalar_select %p47, %s48, %s49
    %p53 = pneg %p47
    %p54 = scmp.eq.s32.totalorder %s12, 1
    %p55 = por %p53, %p54
    %p56 = scmp.ne.s32.totalorder %s48, %s51
    %p57 = scmp.eq.s32.totalorder %s12, 0
    %p58 = por %p56, %p57
    %p59 = scmp.ne.s32.totalorder %s48, %s51
    %p60 = scmp.eq.s32.totalorder %s17, 1
    %p61 = por %p59, %p60
    %p62 = scmp.ne.s32.totalorder %s51, %s52
    %p63 = scmp.eq.s32.totalorder %s17, 0
    %p64 = por %p62, %p63
    %p65 = scmp.ne.s32.totalorder %s51, %s52
    %p66 = scmp.eq.s32.totalorder %s18, 1
    %p67 = por %p65, %p66
    %p69 = scmp.ne.s32.totalorder %s52, %s68
    %p70 = scmp.eq.s32.totalorder %s18, 0
    %p71 = por %p69, %p70
    %s73 = sadd.s32 %s72, 1
    %p76 = scmp.eq.s32.totalorder %s12, 1
    %p77 = scmp.ne.s32.totalorder %s72, %s74
    %p78 = scmp.eq.s32.totalorder %s12, 0
    %p79 = por %p77, %p78
    %p80 = scmp.ne.s32.totalorder %s72, %s74
    %p81 = scmp.eq.s32.totalorder %s17, 1
    %p82 = por %p80, %p81
    %p83 = scmp.ne.s32.totalorder %s74, %s75
    %p84 = scmp.eq.s32.totalorder %s17, 0
    %p85 = por %p83, %p84
    %p86 = scmp.ne.s32.totalorder %s74, %s75
    %p87 = scmp.eq.s32.totalorder %s18, 1
    %p88 = por %p86, %p87
    %p90 = scmp.ne.s32.totalorder %s75, %s89
    %p91 = scmp.eq.s32.totalorder %s18, 0
    %p92 = por %p90, %p91
    %s94 = sadd.s32 %s93, 1
    %p97 = scmp.eq.s32.totalorder %s12, 1
    %p98 = scmp.ne.s32.totalorder %s93, %s95
    %p99 = scmp.eq.s32.totalorder %s12, 0
    %p100 = por %p98, %p99
    %p101 = scmp.ne.s32.totalorder %s93, %s95
    %p102 = scmp.eq.s32.totalorder %s17, 1
    %p103 = por %p101, %p102
    %p104 = scmp.ne.s32.totalorder %s95, %s96
    %p105 = scmp.eq.s32.totalorder %s17, 0
    %p106 = por %p104, %p105
    %p107 = scmp.ne.s32.totalorder %s95, %s96
    %p108 = scmp.eq.s32.totalorder %s18, 1
    %p109 = por %p107, %p108
    %p111 = scmp.ne.s32.totalorder %s96, %s110
    %p112 = scmp.eq.s32.totalorder %s18, 0
    %p113 = por %p111, %p112
    %s115 = sadd.s32 %s114, 1
    %p118 = scmp.eq.s32.totalorder %s12, 1
    %p119 = scmp.ne.s32.totalorder %s114, %s116
    %p120 = scmp.eq.s32.totalorder %s12, 0
    %p121 = por %p119, %p120
    %p122 = scmp.ne.s32.totalorder %s114, %s116
    %p123 = scmp.eq.s32.totalorder %s17, 1
    %p124 = por %p122, %p123
    %p125 = scmp.ne.s32.totalorder %s116, %s117
    %p126 = scmp.eq.s32.totalorder %s17, 0
    %p127 = por %p125, %p126
    %p128 = scmp.ne.s32.totalorder %s116, %s117
    %p129 = scmp.eq.s32.totalorder %s18, 1
    %p130 = por %p128, %p129
    %p132 = scmp.ne.s32.totalorder %s117, %s131
    %p133 = scmp.eq.s32.totalorder %s18, 0
    %p134 = por %p132, %p133
    %s136 = sadd.s32 %s135, 1
    %p139 = scmp.eq.s32.totalorder %s12, 1
    %p140 = scmp.ne.s32.totalorder %s135, %s137
    %p141 = scmp.eq.s32.totalorder %s12, 0
    %p142 = por %p140, %p141
    %p143 = scmp.ne.s32.totalorder %s135, %s137
    %p144 = scmp.eq.s32.totalorder %s17, 1
    %p145 = por %p143, %p144
    %p146 = scmp.ne.s32.totalorder %s137, %s138
    %p147 = scmp.eq.s32.totalorder %s17, 0
    %p148 = por %p146, %p147
    %p149 = scmp.ne.s32.totalorder %s137, %s138
    %p150 = scmp.eq.s32.totalorder %s18, 1
    %p151 = por %p149, %p150
    %p153 = scmp.ne.s32.totalorder %s138, %s152
    %p154 = scmp.eq.s32.totalorder %s18, 0
    %p155 = por %p153, %p154
    %s156 = ssub.s32 %s12, %s19
    %p157 = scmp.eq.s32.totalorder %s156, 0
    %s159 = sadd.s32 %s158, 1
    %s160 = scalar_select %p157, %s158, %s159
    %p163 = pneg %p157
    %p164 = scmp.eq.s32.totalorder %s12, 1
    %p165 = por %p163, %p164
    %p166 = scmp.ne.s32.totalorder %s158, %s161
    %p167 = scmp.eq.s32.totalorder %s12, 0
    %p168 = por %p166, %p167
    %p169 = scmp.ne.s32.totalorder %s158, %s161
    %p170 = scmp.eq.s32.totalorder %s17, 1
    %p171 = por %p169, %p170
    %p172 = scmp.ne.s32.totalorder %s161, %s162
    %p173 = scmp.eq.s32.totalorder %s17, 0
    %p174 = por %p172, %p173
    %p175 = scmp.ne.s32.totalorder %s161, %s162
    %p176 = scmp.eq.s32.totalorder %s18, 1
    %p177 = por %p175, %p176
    %p179 = scmp.ne.s32.totalorder %s162, %s178
    %p180 = scmp.eq.s32.totalorder %s18, 0
    %p181 = por %p179, %p180
    %p182 = scmp.le.s32.totalorder 1, %s12
    %p183 = scmp.lt.s32.totalorder %s12, 3
    %p184 = pnand %p182, %p183
    %p185 = pneg %p184
    // Predicated region
    $region9: #{tpu_custom_call.1} parent=5 // pred_check
      _
    $region10: #{tpu_custom_call.1} parent=5 // pred_check_branch
      %187 = sbr.rel (%p184) target = $region12
    $region11: #{tpu_custom_call.1} parent=5 // pred_region
      %s188 = ssub.s32 %s12, 1
      // Predicated region
      $region13: #{tpu_custom_call.1} parent=11 // pred_check
        %p189 = pneg %p85
      $region14: #{tpu_custom_call.1} parent=11 // pred_check_branch
        %191 = sbr.rel (%p189) target = $region16
      $region15: #{tpu_custom_call.1} parent=11 // pred_region
        _
      $region16: #{tpu_custom_call.1} parent=11 // pred_fallthru
        _
      // Predicated region
      $region17: #{tpu_custom_call.1} parent=11 // pred_check
        %p192 = pneg %p106
      $region18: #{tpu_custom_call.1} parent=11 // pred_check_branch
        %194 = sbr.rel (%p192) target = $region20
      $region19: #{tpu_custom_call.1} parent=11 // pred_region
        _
      $region20: #{tpu_custom_call.1} parent=11 // pred_fallthru
        _
      // Predicated region
      $region21: #{tpu_custom_call.1} parent=11 // pred_check
        %p195 = pneg %p127
      $region22: #{tpu_custom_call.1} parent=11 // pred_check_branch
        %197 = sbr.rel (%p195) target = $region24
      $region23: #{tpu_custom_call.1} parent=11 // pred_region
        _
      $region24: #{tpu_custom_call.1} parent=11 // pred_fallthru
        _
      // Predicated region
      $region25: #{tpu_custom_call.1} parent=11 // pred_check
        %p198 = pneg %p148
      $region26: #{tpu_custom_call.1} parent=11 // pred_check_branch
        %200 = sbr.rel (%p198) target = $region28
      $region27: #{tpu_custom_call.1} parent=11 // pred_region
        _
      $region28: #{tpu_custom_call.1} parent=11 // pred_fallthru
        _
    $region12: #{tpu_custom_call.1} parent=5 // pred_fallthru
      _
    %p201 = scmp.lt.s32.totalorder %s12, 2
    // Predicated region
    $region29: #{tpu_custom_call.1} parent=5 // pred_check
      %p202 = pneg %p201
    $region30: #{tpu_custom_call.1} parent=5 // pred_check_branch
      %204 = sbr.rel (%p202) target = $region32
    $region31: #{tpu_custom_call.1} parent=5 // pred_region
      // Predicated region
      $region33: #{tpu_custom_call.1} parent=31 // pred_check
        %p205 = pneg %p32
      $region34: #{tpu_custom_call.1} parent=31 // pred_check_branch
        %207 = sbr.rel (%p205) target = $region36
      $region35: #{tpu_custom_call.1} parent=31 // pred_region
        %s208 = smul.u32 32, %s12
        %p209 = scmp.lt.s32.totalorder %s208, 63
        %s210 = scalar_select %p209, %s208, 63
        %s211 = smul.addr %s210, 2
        %s212 = smul.addr %s211, 4
        %s213 = scalar_lea.vmem %s0, %s212
        %s214 = smul.u32 32, %s12
      $region36: #{tpu_custom_call.1} parent=31 // pred_fallthru
        _
      // Predicated region
      $region37: #{tpu_custom_call.1} parent=31 // pred_check
        %p215 = pneg %p58
      $region38: #{tpu_custom_call.1} parent=31 // pred_check_branch
        %217 = sbr.rel (%p215) target = $region40
      $region39: #{tpu_custom_call.1} parent=31 // pred_region
        %s218 = smul.u32 32, %s12
        %p219 = scmp.lt.s32.totalorder %s218, 63
        %s220 = scalar_select %p219, %s218, 63
        %s221 = smul.addr %s220, 8
        %s222 = scalar_lea.vmem %s1, %s221
        %s223 = smul.u32 32, %s12
      $region40: #{tpu_custom_call.1} parent=31 // pred_fallthru
        _
    $region32: #{tpu_custom_call.1} parent=5 // pred_fallthru
      _
    %p224 = scmp.le.s32.totalorder 1, %s12
    %p225 = scmp.lt.s32.totalorder %s12, 3
    %p226 = pnand %p224, %p225
    %p227 = pneg %p226
    // Predicated region
    $region41: #{tpu_custom_call.1} parent=5 // pred_check
      _
    $region42: #{tpu_custom_call.1} parent=5 // pred_check_branch
      %229 = sbr.rel (%p226) target = $region44
    $region43: #{tpu_custom_call.1} parent=5 // pred_region
      %s230 = ssub.s32 %s12, 1
      %s231 = smul.u32 32, %s17
      %p232 = scmp.lt.s32.totalorder %s231, 63
      %s233 = scalar_select %p232, %s231, 63
      %s234 = smul.addr %s233, 2
      %s235 = smul.addr %s234, 4
      %s236 = scalar_lea.vmem %s0, %s235
      %p237 = pneg %p38
      %p238 = pneg %p35
      %s239 = smul.u32 32, %s17
      %p240 = scmp.lt.s32.totalorder %s239, 63
      %s241 = scalar_select %p240, %s239, 63
      %s242 = smul.addr %s241, 8
      %s243 = scalar_lea.vmem %s1, %s242
      %p244 = pneg %p64
      %p245 = pneg %p61
      %p246 = pneg %p85
      %p247 = pneg %p82
      %p248 = pneg %p106
      %p249 = pneg %p103
      %p250 = pneg %p127
      %p251 = pneg %p124
      %p252 = pneg %p148
      %p253 = pneg %p145
      %p254 = pneg %p174
      %p255 = pneg %p171
      %s256 = smul.u32 32, %s17
      %p257 = scmp.lt.s32.totalorder %s256, 63
      %s258 = scalar_select %p257, %s256, 63
      %s259 = smul.addr %s258, 8
      %s260 = scalar_lea.vmem %s6, %s259
      %s261 = smul.u32 32, %s17
      %p262 = scmp.lt.s32.totalorder %s261, 63
      %s263 = scalar_select %p262, %s261, 63
      %s264 = smul.addr %s263, 2
      %s265 = smul.addr %s264, 4
      %s266 = scalar_lea.vmem %s0, %s265
      %s267 = smul.u32 32, %s17
      %s268 = smul.u32 32, %s17
      %p269 = scmp.lt.s32.totalorder %s268, 63
      %s270 = scalar_select %p269, %s268, 63
      %s271 = smul.addr %s270, 8
      %s272 = scalar_lea.vmem %s1, %s271
      %s273 = smul.u32 32, %s17
      %s274 = smul.u32 32, %s17
      %p275 = scmp.lt.s32.totalorder %s274, 63
      %s276 = scalar_select %p275, %s274, 63
      %s277 = smul.addr %s276, 8
      %s278 = scalar_lea.vmem %s6, %s277
      %s279 = smul.u32 32, %s17
      %v281 = vld [vmem:[%s266] sm:$0xff]
      %v282 = vld [vmem:[%s266 + $0x8] sm:$0xff]
      %v283 = vld [vmem:[%s266 + $0x10] sm:$0xff]
      %v284 = vld [vmem:[%s266 + $0x18] sm:$0xff]
      %v285 = vld [vmem:[%s266 + $0x20] sm:$0xff]
      %v286 = vld [vmem:[%s266 + $0x28] sm:$0xff]
      %v287 = vld [vmem:[%s266 + $0x30] sm:$0xff]
      %v288 = vld [vmem:[%s266 + $0x38] sm:$0xff]
      %v289 = vld [vmem:[%s266 + $0x40] sm:$0xff]
      %v290 = vld [vmem:[%s266 + $0x48] sm:$0xff]
      %v291 = vld [vmem:[%s266 + $0x50] sm:$0xff]
      %v292 = vld [vmem:[%s266 + $0x58] sm:$0xff]
      %v293 = vld [vmem:[%s266 + $0x60] sm:$0xff]
      %v294 = vld [vmem:[%s266 + $0x68] sm:$0xff]
      %v295 = vld [vmem:[%s266 + $0x70] sm:$0xff]
      %v296 = vld [vmem:[%s266 + $0x78] sm:$0xff]
      %v297 = vld [vmem:[%s266 + $0x80] sm:$0xff]
      %v298 = vld [vmem:[%s266 + $0x88] sm:$0xff]
      %v299 = vld [vmem:[%s266 + $0x90] sm:$0xff]
      %v300 = vld [vmem:[%s266 + $0x98] sm:$0xff]
      %v301 = vld [vmem:[%s266 + $0xa0] sm:$0xff]
      %v302 = vld [vmem:[%s266 + $0xa8] sm:$0xff]
      %v303 = vld [vmem:[%s266 + $0xb0] sm:$0xff]
      %v304 = vld [vmem:[%s266 + $0xb8] sm:$0xff]
      %v305 = vld [vmem:[%s266 + $0xc0] sm:$0xff]
      %v306 = vld [vmem:[%s266 + $0xc8] sm:$0xff]
      %v307 = vld [vmem:[%s266 + $0xd0] sm:$0xff]
      %v308 = vld [vmem:[%s266 + $0xd8] sm:$0xff]
      %v309 = vld [vmem:[%s266 + $0xe0] sm:$0xff]
      %v310 = vld [vmem:[%s266 + $0xe8] sm:$0xff]
      %v311 = vld [vmem:[%s266 + $0xf0] sm:$0xff]
      %v312 = vld [vmem:[%s266 + $0xf8] sm:$0xff]
      %v313 = vld [vmem:[%s272] sm:$0xff]
      %v314 = vld [vmem:[%s272 + $0x8] sm:$0xff]
      %v315 = vld [vmem:[%s272 + $0x10] sm:$0xff]
      %v316 = vld [vmem:[%s272 + $0x18] sm:$0xff]
      %v317 = vld [vmem:[%s272 + $0x20] sm:$0xff]
      %v318 = vld [vmem:[%s272 + $0x28] sm:$0xff]
      %v319 = vld [vmem:[%s272 + $0x30] sm:$0xff]
      %v320 = vld [vmem:[%s272 + $0x38] sm:$0xff]
      %v321 = vld [vmem:[%s272 + $0x40] sm:$0xff]
      %v322 = vld [vmem:[%s272 + $0x48] sm:$0xff]
      %v323 = vld [vmem:[%s272 + $0x50] sm:$0xff]
      %v324 = vld [vmem:[%s272 + $0x58] sm:$0xff]
      %v325 = vld [vmem:[%s272 + $0x60] sm:$0xff]
      %v326 = vld [vmem:[%s272 + $0x68] sm:$0xff]
      %v327 = vld [vmem:[%s272 + $0x70] sm:$0xff]
      %v328 = vld [vmem:[%s272 + $0x78] sm:$0xff]
      %v329 = vld [vmem:[%s272 + $0x80] sm:$0xff]
      %v330 = vld [vmem:[%s272 + $0x88] sm:$0xff]
      %v331 = vld [vmem:[%s272 + $0x90] sm:$0xff]
      %v332 = vld [vmem:[%s272 + $0x98] sm:$0xff]
      %v333 = vld [vmem:[%s272 + $0xa0] sm:$0xff]
      %v334 = vld [vmem:[%s272 + $0xa8] sm:$0xff]
      %v335 = vld [vmem:[%s272 + $0xb0] sm:$0xff]
      %v336 = vld [vmem:[%s272 + $0xb8] sm:$0xff]
      %v337 = vld [vmem:[%s272 + $0xc0] sm:$0xff]
      %v338 = vld [vmem:[%s272 + $0xc8] sm:$0xff]
      %v339 = vld [vmem:[%s272 + $0xd0] sm:$0xff]
      %v340 = vld [vmem:[%s272 + $0xd8] sm:$0xff]
      %v341 = vld [vmem:[%s272 + $0xe0] sm:$0xff]
      %v342 = vld [vmem:[%s272 + $0xe8] sm:$0xff]
      %v343 = vld [vmem:[%s272 + $0xf0] sm:$0xff]
      %v344 = vld [vmem:[%s272 + $0xf8] sm:$0xff]
      %v345 = vpack.c.bf16 %v314, %v313
      %v346 = vpack.c.bf16 %v316, %v315
      %v347 = vpack.c.bf16 %v318, %v317
      %v348 = vpack.c.bf16 %v320, %v319
      %v349 = vpack.c.bf16 %v322, %v321
      %v350 = vpack.c.bf16 %v324, %v323
      %v351 = vpack.c.bf16 %v326, %v325
      %v352 = vpack.c.bf16 %v328, %v327
      %v353 = vpack.c.bf16 %v330, %v329
      %v354 = vpack.c.bf16 %v332, %v331
      %v355 = vpack.c.bf16 %v334, %v333
      %v356 = vpack.c.bf16 %v336, %v335
      %v357 = vpack.c.bf16 %v338, %v337
      %v358 = vpack.c.bf16 %v340, %v339
      %v359 = vpack.c.bf16 %v342, %v341
      %v360 = vpack.c.bf16 %v344, %v343
      %v393 = vunpack.c.l.b16 %v281
      %v394 = vunpack.c.h.b16 %v281
      %v395 = vunpack.c.l.b16 %v282
      %v396 = vunpack.c.h.b16 %v282
      %v397 = vunpack.c.l.b16 %v283
      %v398 = vunpack.c.h.b16 %v283
      %v399 = vunpack.c.l.b16 %v284
      %v400 = vunpack.c.h.b16 %v284
      %v401 = vunpack.c.l.b16 %v285
      %v402 = vunpack.c.h.b16 %v285
      %v403 = vunpack.c.l.b16 %v286
      %v404 = vunpack.c.h.b16 %v286
      %v405 = vunpack.c.l.b16 %v287
      %v406 = vunpack.c.h.b16 %v287
      %v407 = vunpack.c.l.b16 %v288
      %v408 = vunpack.c.h.b16 %v288
      %v409 = vunpack.c.l.b16 %v289
      %v410 = vunpack.c.h.b16 %v289
      %v411 = vunpack.c.l.b16 %v290
      %v412 = vunpack.c.h.b16 %v290
      %v413 = vunpack.c.l.b16 %v291
      %v414 = vunpack.c.h.b16 %v291
      %v415 = vunpack.c.l.b16 %v292
      %v416 = vunpack.c.h.b16 %v292
      %v417 = vunpack.c.l.b16 %v293
      %v418 = vunpack.c.h.b16 %v293
      %v419 = vunpack.c.l.b16 %v294
      %v420 = vunpack.c.h.b16 %v294
      %v421 = vunpack.c.l.b16 %v295
      %v422 = vunpack.c.h.b16 %v295
      %v423 = vunpack.c.l.b16 %v296
      %v424 = vunpack.c.h.b16 %v296
      %v425 = vunpack.c.l.b16 %v297
      %v426 = vunpack.c.h.b16 %v297
      %v427 = vunpack.c.l.b16 %v298
      %v428 = vunpack.c.h.b16 %v298
      %v429 = vunpack.c.l.b16 %v299
      %v430 = vunpack.c.h.b16 %v299
      %v431 = vunpack.c.l.b16 %v300
      %v432 = vunpack.c.h.b16 %v300
      %v433 = vunpack.c.l.b16 %v301
      %v434 = vunpack.c.h.b16 %v301
      %v435 = vunpack.c.l.b16 %v302
      %v436 = vunpack.c.h.b16 %v302
      %v437 = vunpack.c.l.b16 %v303
      %v438 = vunpack.c.h.b16 %v303
      %v439 = vunpack.c.l.b16 %v304
      %v440 = vunpack.c.h.b16 %v304
      %v441 = vunpack.c.l.b16 %v305
      %v442 = vunpack.c.h.b16 %v305
      %v443 = vunpack.c.l.b16 %v306
      %v444 = vunpack.c.h.b16 %v306
      %v445 = vunpack.c.l.b16 %v307
      %v446 = vunpack.c.h.b16 %v307
      %v447 = vunpack.c.l.b16 %v308
      %v448 = vunpack.c.h.b16 %v308
      %v449 = vunpack.c.l.b16 %v309
      %v450 = vunpack.c.h.b16 %v309
      %v451 = vunpack.c.l.b16 %v310
      %v452 = vunpack.c.h.b16 %v310
      %v453 = vunpack.c.l.b16 %v311
      %v454 = vunpack.c.h.b16 %v311
      %v455 = vunpack.c.l.b16 %v312
      %v456 = vunpack.c.h.b16 %v312
      %v457 = vpack.c.b16 %v395, %v393
      %v458 = vpack.c.b16 %v396, %v394
      %v459 = vpack.c.b16 %v399, %v397
      %v460 = vpack.c.b16 %v400, %v398
      %v461 = vpack.c.b16 %v403, %v401
      %v462 = vpack.c.b16 %v404, %v402
      %v463 = vpack.c.b16 %v407, %v405
      %v464 = vpack.c.b16 %v408, %v406
      %v465 = vpack.c.b16 %v411, %v409
      %v466 = vpack.c.b16 %v412, %v410
      %v467 = vpack.c.b16 %v415, %v413
      %v468 = vpack.c.b16 %v416, %v414
      %v469 = vpack.c.b16 %v419, %v417
      %v470 = vpack.c.b16 %v420, %v418
      %v471 = vpack.c.b16 %v423, %v421
      %v472 = vpack.c.b16 %v424, %v422
      %v473 = vpack.c.b16 %v427, %v425
      %v474 = vpack.c.b16 %v428, %v426
      %v475 = vpack.c.b16 %v431, %v429
      %v476 = vpack.c.b16 %v432, %v430
      %v477 = vpack.c.b16 %v435, %v433
      %v478 = vpack.c.b16 %v436, %v434
      %v479 = vpack.c.b16 %v439, %v437
      %v480 = vpack.c.b16 %v440, %v438
      %v481 = vpack.c.b16 %v443, %v441
      %v482 = vpack.c.b16 %v444, %v442
      %v483 = vpack.c.b16 %v447, %v445
      %v484 = vpack.c.b16 %v448, %v446
      %v485 = vpack.c.b16 %v451, %v449
      %v486 = vpack.c.b16 %v452, %v450
      %v487 = vpack.c.b16 %v455, %v453
      %v488 = vpack.c.b16 %v456, %v454
      %521 = vmatprep.subr.bf16.mxu0 0
      %522 = vmatpush1.bf16.msra.mxu0 %v345
      %523 = vmatprep.subr.bf16.mxu0 0
      %524 = vmatpush1.bf16.msra.mxu0 %v346
      %525 = vmatprep.subr.bf16.mxu0 0
      %526 = vmatpush1.bf16.msra.mxu0 %v347
      %527 = vmatprep.subr.bf16.mxu0 0
      %528 = vmatpush1.bf16.msra.mxu0 %v348
      %529 = vmatprep.subr.bf16.mxu0 0
      %530 = vmatpush1.bf16.msra.mxu0 %v349
      %531 = vmatprep.subr.bf16.mxu0 0
      %532 = vmatpush1.bf16.msra.mxu0 %v350
      %533 = vmatprep.subr.bf16.mxu0 0
      %534 = vmatpush1.bf16.msra.mxu0 %v351
      %535 = vmatprep.subr.bf16.mxu0 0
      %536 = vmatpush1.bf16.msra.mxu0 %v352
      %537 = vmatprep.subr.bf16.mxu0 0
      %538 = vmatpush1.bf16.msra.mxu0 %v353
      %539 = vmatprep.subr.bf16.mxu0 0
      %540 = vmatpush1.bf16.msra.mxu0 %v354
      %541 = vmatprep.subr.bf16.mxu0 0
      %542 = vmatpush1.bf16.msra.mxu0 %v355
      %543 = vmatprep.subr.bf16.mxu0 0
      %544 = vmatpush1.bf16.msra.mxu0 %v356
      %545 = vmatprep.subr.bf16.mxu0 0
      %546 = vmatpush1.bf16.msra.mxu0 %v357
      %547 = vmatprep.subr.bf16.mxu0 0
      %548 = vmatpush1.bf16.msra.mxu0 %v358
      %549 = vmatprep.subr.bf16.mxu0 0
      %550 = vmatpush1.bf16.msra.mxu0 %v359
      %551 = vmatprep.subr.bf16.mxu0 0
      %552 = vmatpush1.bf16.msra.mxu0 %v360
      %553 = vmatprep.mubr.bf16.mxu0 %v458
      %554 = vmatmul.mubr.bf16.gmra.mrb[0].mxu0 %v457
      %v555 = vpop.f32.mrb[0].mxu0
      %v556 = vadd.f32 0.0, %v555
      %v557 = vpop.f32.mrb[0].mxu0
      %v558 = vpop.f32.mrb[0].mxu0
      %v559 = vadd.f32 0.0, %v558
      %v560 = vpop.f32.mrb[0].mxu0
      %561 = vmatprep.mubr.bf16.mxu0 %v460
      %562 = vmatmul.mubr.bf16.gmra.mrb[0].mxu0 %v459
      %v563 = vpop.f32.mrb[0].mxu0
      %v564 = vadd.f32 0.0, %v563
      %v565 = vpop.f32.mrb[0].mxu0
      %v566 = vpop.f32.mrb[0].mxu0
      %v567 = vadd.f32 0.0, %v566
      %v568 = vpop.f32.mrb[0].mxu0
      %569 = vmatprep.mubr.bf16.mxu0 %v462
      %570 = vmatmul.mubr.bf16.gmra.mrb[0].mxu0 %v461
      %v571 = vpop.f32.mrb[0].mxu0
      %v572 = vadd.f32 0.0, %v571
      %v573 = vpop.f32.mrb[0].mxu0
      %v574 = vpop.f32.mrb[0].mxu0
      %v575 = vadd.f32 0.0, %v574
      %v576 = vpop.f32.mrb[0].mxu0
      %577 = vmatprep.mubr.bf16.mxu0 %v464
      %578 = vmatmul.mubr.bf16.gmra.mrb[0].mxu0 %v463
      %v579 = vpop.f32.mrb[0].mxu0
      %v580 = vadd.f32 0.0, %v579
      %v581 = vpop.f32.mrb[0].mxu0
      %v582 = vpop.f32.mrb[0].mxu0
      %v583 = vadd.f32 0.0, %v582
      %v584 = vpop.f32.mrb[0].mxu0
      %585 = vmatprep.mubr.bf16.mxu0 %v466
      %586 = vmatmul.mubr.bf16.gmra.mrb[0].mxu0 %v465
      %v587 = vpop.f32.mrb[0].mxu0
      %v588 = vadd.f32 0.0, %v587
      %v589 = vpop.f32.mrb[0].mxu0
      %v590 = vpop.f32.mrb[0].mxu0
      %v591 = vadd.f32 0.0, %v590
      %v592 = vpop.f32.mrb[0].mxu0
      %593 = vmatprep.mubr.bf16.mxu0 %v468
      %594 = vmatmul.mubr.bf16.gmra.mrb[0].mxu0 %v467
      %v595 = vpop.f32.mrb[0].mxu0
      %v596 = vadd.f32 0.0, %v595
      %v597 = vpop.f32.mrb[0].mxu0
      %v598 = vpop.f32.mrb[0].mxu0
      %v599 = vadd.f32 0.0, %v598
      %v600 = vpop.f32.mrb[0].mxu0
      %601 = vmatprep.mubr.bf16.mxu0 %v470
      %602 = vmatmul.mubr.bf16.gmra.mrb[0].mxu0 %v469
      %v603 = vpop.f32.mrb[0].mxu0
      %v604 = vadd.f32 0.0, %v603
      %v605 = vpop.f32.mrb[0].mxu0
      %v606 = vpop.f32.mrb[0].mxu0
      %v607 = vadd.f32 0.0, %v606
      %v608 = vpop.f32.mrb[0].mxu0
      %609 = vmatprep.mubr.bf16.mxu0 %v472
      %610 = vmatmul.mubr.bf16.gmra.mrb[0].mxu0 %v471
      %v611 = vpop.f32.mrb[0].mxu0
      %v612 = vadd.f32 0.0, %v611
      %v613 = vpop.f32.mrb[0].mxu0
      %v614 = vpop.f32.mrb[0].mxu0
      %v615 = vadd.f32 0.0, %v614
      %v616 = vpop.f32.mrb[0].mxu0
      %617 = vmatprep.mubr.bf16.mxu0 %v474
      %618 = vmatmul.mubr.bf16.gmra.mrb[0].mxu0 %v473
      %v619 = vpop.f32.mrb[0].mxu0
      %v620 = vadd.f32 0.0, %v619
      %v621 = vpop.f32.mrb[0].mxu0
      %v622 = vpop.f32.mrb[0].mxu0
      %v623 = vadd.f32 0.0, %v622
      %v624 = vpop.f32.mrb[0].mxu0
      %625 = vmatprep.mubr.bf16.mxu0 %v476
      %626 = vmatmul.mubr.bf16.gmra.mrb[0].mxu0 %v475
      %v627 = vpop.f32.mrb[0].mxu0
      %v628 = vadd.f32 0.0, %v627
      %v629 = vpop.f32.mrb[0].mxu0
      %v630 = vpop.f32.mrb[0].mxu0
      %v631 = vadd.f32 0.0, %v630
      %v632 = vpop.f32.mrb[0].mxu0
      %633 = vmatprep.mubr.bf16.mxu0 %v478
      %634 = vmatmul.mubr.bf16.gmra.mrb[0].mxu0 %v477
      %v635 = vpop.f32.mrb[0].mxu0
      %v636 = vadd.f32 0.0, %v635
      %v637 = vpop.f32.mrb[0].mxu0
      %v638 = vpop.f32.mrb[0].mxu0
      %v639 = vadd.f32 0.0, %v638
      %v640 = vpop.f32.mrb[0].mxu0
      %641 = vmatprep.mubr.bf16.mxu0 %v480
      %642 = vmatmul.mubr.bf16.gmra.mrb[0].mxu0 %v479
      %v643 = vpop.f32.mrb[0].mxu0
      %v644 = vadd.f32 0.0, %v643
      %v645 = vpop.f32.mrb[0].mxu0
      %v646 = vpop.f32.mrb[0].mxu0
      %v647 = vadd.f32 0.0, %v646
      %v648 = vpop.f32.mrb[0].mxu0
      %649 = vmatprep.mubr.bf16.mxu0 %v482
      %650 = vmatmul.mubr.bf16.gmra.mrb[0].mxu0 %v481
      %v651 = vpop.f32.mrb[0].mxu0
      %v652 = vadd.f32 0.0, %v651
      %v653 = vpop.f32.mrb[0].mxu0
      %v654 = vpop.f32.mrb[0].mxu0
      %v655 = vadd.f32 0.0, %v654
      %v656 = vpop.f32.mrb[0].mxu0
      %657 = vmatprep.mubr.bf16.mxu0 %v484
      %658 = vmatmul.mubr.bf16.gmra.mrb[0].mxu0 %v483
      %v659 = vpop.f32.mrb[0].mxu0
      %v660 = vadd.f32 0.0, %v659
      %v661 = vpop.f32.mrb[0].mxu0
      %v662 = vpop.f32.mrb[0].mxu0
      %v663 = vadd.f32 0.0, %v662
      %v664 = vpop.f32.mrb[0].mxu0
      %665 = vmatprep.mubr.bf16.mxu0 %v486
      %666 = vmatmul.mubr.bf16.gmra.mrb[0].mxu0 %v485
      %v667 = vpop.f32.mrb[0].mxu0
      %v668 = vadd.f32 0.0, %v667
      %v669 = vpop.f32.mrb[0].mxu0
      %v670 = vpop.f32.mrb[0].mxu0
      %v671 = vadd.f32 0.0, %v670
      %v672 = vpop.f32.mrb[0].mxu0
      %673 = vmatprep.mubr.bf16.mxu0 %v488
      %674 = vmatmul.mubr.bf16.gmra.mrb[0].mxu0 %v487
      %v675 = vpop.f32.mrb[0].mxu0
      %v676 = vadd.f32 0.0, %v675
      %v677 = vpop.f32.mrb[0].mxu0
      %v678 = vpop.f32.mrb[0].mxu0
      %v679 = vadd.f32 0.0, %v678
      %v680 = vpop.f32.mrb[0].mxu0
      %681 = vdwg.mxu0
      %v682 = vpack.c.bf16 %v559, %v556
      %v683 = vpack.c.bf16 %v567, %v564
      %v684 = vpack.c.bf16 %v575, %v572
      %v685 = vpack.c.bf16 %v583, %v580
      %v686 = vpack.c.bf16 %v591, %v588
      %v687 = vpack.c.bf16 %v599, %v596
      %v688 = vpack.c.bf16 %v607, %v604
      %v689 = vpack.c.bf16 %v615, %v612
      %v690 = vpack.c.bf16 %v623, %v620
      %v691 = vpack.c.bf16 %v631, %v628
      %v692 = vpack.c.bf16 %v639, %v636
      %v693 = vpack.c.bf16 %v647, %v644
      %v694 = vpack.c.bf16 %v655, %v652
      %v695 = vpack.c.bf16 %v663, %v660
      %v696 = vpack.c.bf16 %v671, %v668
      %v697 = vpack.c.bf16 %v679, %v676
      %v698 = vld [vmem:[%s2] sm:$0xf]
      %v699 = vld [vmem:[%s2 + $0x4] sm:$0xf]
      %v700 = vld [vmem:[%s2 + $0x8] sm:$0xf]
      %v701 = vld [vmem:[%s2 + $0xc] sm:$0xf]
      %v702 = vld [vmem:[%s3] sm:$0x1]
      %v704 = vlaneseq
      %v705 = vshrl.u32 %v704, 7
      %v706 = vsub.s32 0, %v705
      %v707 = vrot.slane %v702, %v706
      %v713 = vunpack.c.l.b16 %v698
      %v714 = vunpack.c.l.b16 %v699
      %v715 = vunpack.c.l.b16 %v700
      %v716 = vunpack.c.l.b16 %v701
      %v717 = vpack.c.b16 %v714, %v713
      %v718 = vpack.c.b16 %v716, %v715
      %vm721 = vcmask 261120
      %v723 = vsel %vm721, %v682, 0
      %v726 = vsel %vm721, %v683, 0
      %v729 = vsel %vm721, %v684, 0
      %v732 = vsel %vm721, %v685, 0
      %v735 = vsel %vm721, %v686, 0
      %v738 = vsel %vm721, %v687, 0
      %v741 = vsel %vm721, %v688, 0
      %v744 = vsel %vm721, %v689, 0
      %v747 = vsel %vm721, %v690, 0
      %v750 = vsel %vm721, %v691, 0
      %v753 = vsel %vm721, %v692, 0
      %v756 = vsel %vm721, %v693, 0
      %v759 = vsel %vm721, %v694, 0
      %v762 = vsel %vm721, %v695, 0
      %v765 = vsel %vm721, %v696, 0
      %v768 = vsel %vm721, %v697, 0
      %770 = vmatprep.subr.bf16.mxu0 0
      %771 = vmatpush1.bf16.msra.mxu0 %v717
      %772 = vmatprep.subr.bf16.mxu0 0
      %773 = vmatpush1.bf16.msra.mxu0 %v718
      %774 = vmatprep.subr.bf16.mxu0 0
      %775 = vmatpush1.bf16.msra.mxu0 0
      %776 = vmatprep.subr.bf16.mxu0 0
      %777 = vmatpush1.bf16.msra.mxu0 0
      %778 = vmatprep.subr.bf16.mxu0 0
      %779 = vmatpush1.bf16.msra.mxu0 0
      %780 = vmatprep.subr.bf16.mxu0 0
      %781 = vmatpush1.bf16.msra.mxu0 0
      %782 = vmatprep.subr.bf16.mxu0 0
      %783 = vmatpush1.bf16.msra.mxu0 0
      %784 = vmatprep.subr.bf16.mxu0 0
      %785 = vmatpush1.bf16.msra.mxu0 0
      %786 = vmatprep.subr.bf16.mxu0 0
      %787 = vmatpush1.bf16.msra.mxu0 0
      %788 = vmatprep.subr.bf16.mxu0 0
      %789 = vmatpush1.bf16.msra.mxu0 0
      %790 = vmatprep.subr.bf16.mxu0 0
      %791 = vmatpush1.bf16.msra.mxu0 0
      %792 = vmatprep.subr.bf16.mxu0 0
      %793 = vmatpush1.bf16.msra.mxu0 0
      %794 = vmatprep.subr.bf16.mxu0 0
      %795 = vmatpush1.bf16.msra.mxu0 0
      %796 = vmatprep.subr.bf16.mxu0 0
      %797 = vmatpush1.bf16.msra.mxu0 0
      %798 = vmatprep.subr.bf16.mxu0 0
      %799 = vmatpush1.bf16.msra.mxu0 0
      %800 = vmatprep.subr.bf16.mxu0 0
      %801 = vmatpush1.bf16.msra.mxu0 0
      %802 = vmatprep.mubr.bf16.mxu0 0
      %803 = vmatmul.mubr.bf16.gmra.mrb[0].mxu0 %v723
      %v804 = vpop.f32.mrb[0].mxu0
      %v805 = vadd.f32 %v707, %v804
      %v806 = vpop.f32.mrb[0].mxu0
      %v807 = vpop.f32.mrb[0].mxu0
      %v808 = vadd.f32 %v707, %v807
      %v809 = vpop.f32.mrb[0].mxu0
      %810 = vmatprep.mubr.bf16.mxu0 0
      %811 = vmatmul.mubr.bf16.gmra.mrb[0].mxu0 %v726
      %v812 = vpop.f32.mrb[0].mxu0
      %v813 = vadd.f32 %v707, %v812
      %v814 = vpop.f32.mrb[0].mxu0
      %v815 = vpop.f32.mrb[0].mxu0
      %v816 = vadd.f32 %v707, %v815
      %v817 = vpop.f32.mrb[0].mxu0
      %818 = vmatprep.mubr.bf16.mxu0 0
      %819 = vmatmul.mubr.bf16.gmra.mrb[0].mxu0 %v729
      %v820 = vpop.f32.mrb[0].mxu0
      %v821 = vadd.f32 %v707, %v820
      %v822 = vpop.f32.mrb[0].mxu0
      %v823 = vpop.f32.mrb[0].mxu0
      %v824 = vadd.f32 %v707, %v823
      %v825 = vpop.f32.mrb[0].mxu0
      %826 = vmatprep.mubr.bf16.mxu0 0
      %827 = vmatmul.mubr.bf16.gmra.mrb[0].mxu0 %v732
      %v828 = vpop.f32.mrb[0].mxu0
      %v829 = vadd.f32 %v707, %v828
      %v830 = vpop.f32.mrb[0].mxu0
      %v831 = vpop.f32.mrb[0].mxu0
      %v832 = vadd.f32 %v707, %v831
      %v833 = vpop.f32.mrb[0].mxu0
      %834 = vmatprep.mubr.bf16.mxu0 0
      %835 = vmatmul.mubr.bf16.gmra.mrb[0].mxu0 %v735
      %v836 = vpop.f32.mrb[0].mxu0
      %v837 = vadd.f32 %v707, %v836
      %v838 = vpop.f32.mrb[0].mxu0
      %v839 = vpop.f32.mrb[0].mxu0
      %v840 = vadd.f32 %v707, %v839
      %v841 = vpop.f32.mrb[0].mxu0
      %842 = vmatprep.mubr.bf16.mxu0 0
      %843 = vmatmul.mubr.bf16.gmra.mrb[0].mxu0 %v738
      %v844 = vpop.f32.mrb[0].mxu0
      %v845 = vadd.f32 %v707, %v844
      %v846 = vpop.f32.mrb[0].mxu0
      %v847 = vpop.f32.mrb[0].mxu0
      %v848 = vadd.f32 %v707, %v847
      %v849 = vpop.f32.mrb[0].mxu0
      %850 = vmatprep.mubr.bf16.mxu0 0
      %851 = vmatmul.mubr.bf16.gmra.mrb[0].mxu0 %v741
      %v852 = vpop.f32.mrb[0].mxu0
      %v853 = vadd.f32 %v707, %v852
      %v854 = vpop.f32.mrb[0].mxu0
      %v855 = vpop.f32.mrb[0].mxu0
      %v856 = vadd.f32 %v707, %v855
      %v857 = vpop.f32.mrb[0].mxu0
      %858 = vmatprep.mubr.bf16.mxu0 0
      %859 = vmatmul.mubr.bf16.gmra.mrb[0].mxu0 %v744
      %v860 = vpop.f32.mrb[0].mxu0
      %v861 = vadd.f32 %v707, %v860
      %v862 = vpop.f32.mrb[0].mxu0
      %v863 = vpop.f32.mrb[0].mxu0
      %v864 = vadd.f32 %v707, %v863
      %v865 = vpop.f32.mrb[0].mxu0
      %866 = vmatprep.mubr.bf16.mxu0 0
      %867 = vmatmul.mubr.bf16.gmra.mrb[0].mxu0 %v747
      %v868 = vpop.f32.mrb[0].mxu0
      %v869 = vadd.f32 %v707, %v868
      %v870 = vpop.f32.mrb[0].mxu0
      %v871 = vpop.f32.mrb[0].mxu0
      %v872 = vadd.f32 %v707, %v871
      %v873 = vpop.f32.mrb[0].mxu0
      %874 = vmatprep.mubr.bf16.mxu0 0
      %875 = vmatmul.mubr.bf16.gmra.mrb[0].mxu0 %v750
      %v876 = vpop.f32.mrb[0].mxu0
      %v877 = vadd.f32 %v707, %v876
      %v878 = vpop.f32.mrb[0].mxu0
      %v879 = vpop.f32.mrb[0].mxu0
      %v880 = vadd.f32 %v707, %v879
      %v881 = vpop.f32.mrb[0].mxu0
      %882 = vmatprep.mubr.bf16.mxu0 0
      %883 = vmatmul.mubr.bf16.gmra.mrb[0].mxu0 %v753
      %v884 = vpop.f32.mrb[0].mxu0
      %v885 = vadd.f32 %v707, %v884
      %v886 = vpop.f32.mrb[0].mxu0
      %v887 = vpop.f32.mrb[0].mxu0
      %v888 = vadd.f32 %v707, %v887
      %v889 = vpop.f32.mrb[0].mxu0
      %890 = vmatprep.mubr.bf16.mxu0 0
      %891 = vmatmul.mubr.bf16.gmra.mrb[0].mxu0 %v756
      %v892 = vpop.f32.mrb[0].mxu0
      %v893 = vadd.f32 %v707, %v892
      %v894 = vpop.f32.mrb[0].mxu0
      %v895 = vpop.f32.mrb[0].mxu0
      %v896 = vadd.f32 %v707, %v895
      %v897 = vpop.f32.mrb[0].mxu0
      %898 = vmatprep.mubr.bf16.mxu0 0
      %899 = vmatmul.mubr.bf16.gmra.mrb[0].mxu0 %v759
      %v900 = vpop.f32.mrb[0].mxu0
      %v901 = vadd.f32 %v707, %v900
      %v902 = vpop.f32.mrb[0].mxu0
      %v903 = vpop.f32.mrb[0].mxu0
      %v904 = vadd.f32 %v707, %v903
      %v905 = vpop.f32.mrb[0].mxu0
      %906 = vmatprep.mubr.bf16.mxu0 0
      %907 = vmatmul.mubr.bf16.gmra.mrb[0].mxu0 %v762
      %v908 = vpop.f32.mrb[0].mxu0
      %v909 = vadd.f32 %v707, %v908
      %v910 = vpop.f32.mrb[0].mxu0
      %v911 = vpop.f32.mrb[0].mxu0
      %v912 = vadd.f32 %v707, %v911
      %v913 = vpop.f32.mrb[0].mxu0
      %914 = vmatprep.mubr.bf16.mxu0 0
      %915 = vmatmul.mubr.bf16.gmra.mrb[0].mxu0 %v765
      %v916 = vpop.f32.mrb[0].mxu0
      %v917 = vadd.f32 %v707, %v916
      %v918 = vpop.f32.mrb[0].mxu0
      %v919 = vpop.f32.mrb[0].mxu0
      %v920 = vadd.f32 %v707, %v919
      %v921 = vpop.f32.mrb[0].mxu0
      %922 = vmatprep.mubr.bf16.mxu0 0
      %923 = vmatmul.mubr.bf16.gmra.mrb[0].mxu0 %v768
      %v924 = vpop.f32.mrb[0].mxu0
      %v925 = vadd.f32 %v707, %v924
      %v926 = vpop.f32.mrb[0].mxu0
      %v927 = vpop.f32.mrb[0].mxu0
      %v928 = vadd.f32 %v707, %v927
      %v929 = vpop.f32.mrb[0].mxu0
      %930 = vdwg.mxu0
      %v931 = vmax.f32 %v805, 0.0
      %v932 = vmax.f32 %v808, 0.0
      %v933 = vmax.f32 %v813, 0.0
      %v934 = vmax.f32 %v816, 0.0
      %v935 = vmax.f32 %v821, 0.0
      %v936 = vmax.f32 %v824, 0.0
      %v937 = vmax.f32 %v829, 0.0
      %v938 = vmax.f32 %v832, 0.0
      %v939 = vmax.f32 %v837, 0.0
      %v940 = vmax.f32 %v840, 0.0
      %v941 = vmax.f32 %v845, 0.0
      %v942 = vmax.f32 %v848, 0.0
      %v943 = vmax.f32 %v853, 0.0
      %v944 = vmax.f32 %v856, 0.0
      %v945 = vmax.f32 %v861, 0.0
      %v946 = vmax.f32 %v864, 0.0
      %v947 = vmax.f32 %v869, 0.0
      %v948 = vmax.f32 %v872, 0.0
      %v949 = vmax.f32 %v877, 0.0
      %v950 = vmax.f32 %v880, 0.0
      %v951 = vmax.f32 %v885, 0.0
      %v952 = vmax.f32 %v888, 0.0
      %v953 = vmax.f32 %v893, 0.0
      %v954 = vmax.f32 %v896, 0.0
      %v955 = vmax.f32 %v901, 0.0
      %v956 = vmax.f32 %v904, 0.0
      %v957 = vmax.f32 %v909, 0.0
      %v958 = vmax.f32 %v912, 0.0
      %v959 = vmax.f32 %v917, 0.0
      %v960 = vmax.f32 %v920, 0.0
      %v961 = vmax.f32 %v925, 0.0
      %v962 = vmax.f32 %v928, 0.0
      %v963 = vpack.c.bf16 %v932, %v931
      %v964 = vpack.c.bf16 %v934, %v933
      %v965 = vpack.c.bf16 %v936, %v935
      %v966 = vpack.c.bf16 %v938, %v937
      %v967 = vpack.c.bf16 %v940, %v939
      %v968 = vpack.c.bf16 %v942, %v941
      %v969 = vpack.c.bf16 %v944, %v943
      %v970 = vpack.c.bf16 %v946, %v945
      %v971 = vpack.c.bf16 %v948, %v947
      %v972 = vpack.c.bf16 %v950, %v949
      %v973 = vpack.c.bf16 %v952, %v951
      %v974 = vpack.c.bf16 %v954, %v953
      %v975 = vpack.c.bf16 %v956, %v955
      %v976 = vpack.c.bf16 %v958, %v957
      %v977 = vpack.c.bf16 %v960, %v959
      %v978 = vpack.c.bf16 %v962, %v961
      %s979 = scalar_lea.vmem %s2, 16
      %v980 = vld [vmem:[%s979] sm:$0xf]
      %v981 = vld [vmem:[%s979 + $0x4] sm:$0xf]
      %v982 = vld [vmem:[%s979 + $0x8] sm:$0xf]
      %v983 = vld [vmem:[%s979 + $0xc] sm:$0xf]
      %s984 = scalar_lea.vmem %s3, 1
      %v985 = vld [vmem:[%s984] sm:$0x1]
      %v987 = vlaneseq
      %v988 = vshrl.u32 %v987, 7
      %v989 = vsub.s32 0, %v988
      %v990 = vrot.slane %v985, %v989
      %v996 = vunpack.c.l.b16 %v980
      %v997 = vunpack.c.l.b16 %v981
      %v998 = vunpack.c.l.b16 %v982
      %v999 = vunpack.c.l.b16 %v983
      %v1000 = vpack.c.b16 %v997, %v996
      %v1001 = vpack.c.b16 %v999, %v998
      %v1005 = vsel %vm721, %v345, 0
      %v1008 = vsel %vm721, %v346, 0
      %v1011 = vsel %vm721, %v347, 0
      %v1014 = vsel %vm721, %v348, 0
      %v1017 = vsel %vm721, %v349, 0
      %v1020 = vsel %vm721, %v350, 0
      %v1023 = vsel %vm721, %v351, 0
      %v1026 = vsel %vm721, %v352, 0
      %v1029 = vsel %vm721, %v353, 0
      %v1032 = vsel %vm721, %v354, 0
      %v1035 = vsel %vm721, %v355, 0
      %v1038 = vsel %vm721, %v356, 0
      %v1041 = vsel %vm721, %v357, 0
      %v1044 = vsel %vm721, %v358, 0
      %v1047 = vsel %vm721, %v359, 0
      %v1050 = vsel %vm721, %v360, 0
      %1052 = vmatprep.subr.bf16.mxu0 0
      %1053 = vmatpush1.bf16.msra.mxu0 %v1000
      %1054 = vmatprep.subr.bf16.mxu0 0
      %1055 = vmatpush1.bf16.msra.mxu0 %v1001
      %1056 = vmatprep.subr.bf16.mxu0 0
      %1057 = vmatpush1.bf16.msra.mxu0 0
      %1058 = vmatprep.subr.bf16.mxu0 0
      %1059 = vmatpush1.bf16.msra.mxu0 0
      %1060 = vmatprep.subr.bf16.mxu0 0
      %1061 = vmatpush1.bf16.msra.mxu0 0
      %1062 = vmatprep.subr.bf16.mxu0 0
      %1063 = vmatpush1.bf16.msra.mxu0 0
      %1064 = vmatprep.subr.bf16.mxu0 0
      %1065 = vmatpush1.bf16.msra.mxu0 0
      %1066 = vmatprep.subr.bf16.mxu0 0
      %1067 = vmatpush1.bf16.msra.mxu0 0
      %1068 = vmatprep.subr.bf16.mxu0 0
      %1069 = vmatpush1.bf16.msra.mxu0 0
      %1070 = vmatprep.subr.bf16.mxu0 0
      %1071 = vmatpush1.bf16.msra.mxu0 0
      %1072 = vmatprep.subr.bf16.mxu0 0
      %1073 = vmatpush1.bf16.msra.mxu0 0
      %1074 = vmatprep.subr.bf16.mxu0 0
      %1075 = vmatpush1.bf16.msra.mxu0 0
      %1076 = vmatprep.subr.bf16.mxu0 0
      %1077 = vmatpush1.bf16.msra.mxu0 0
      %1078 = vmatprep.subr.bf16.mxu0 0
      %1079 = vmatpush1.bf16.msra.mxu0 0
      %1080 = vmatprep.subr.bf16.mxu0 0
      %1081 = vmatpush1.bf16.msra.mxu0 0
      %1082 = vmatprep.subr.bf16.mxu0 0
      %1083 = vmatpush1.bf16.msra.mxu0 0
      %1084 = vmatprep.mubr.bf16.mxu0 0
      %1085 = vmatmul.mubr.bf16.gmra.mrb[0].mxu0 %v1005
      %v1086 = vpop.f32.mrb[0].mxu0
      %v1087 = vadd.f32 %v990, %v1086
      %v1088 = vpop.f32.mrb[0].mxu0
      %v1089 = vpop.f32.mrb[0].mxu0
      %v1090 = vadd.f32 %v990, %v1089
      %v1091 = vpop.f32.mrb[0].mxu0
      %1092 = vmatprep.mubr.bf16.mxu0 0
      %1093 = vmatmul.mubr.bf16.gmra.mrb[0].mxu0 %v1008
      %v1094 = vpop.f32.mrb[0].mxu0
      %v1095 = vadd.f32 %v990, %v1094
      %v1096 = vpop.f32.mrb[0].mxu0
      %v1097 = vpop.f32.mrb[0].mxu0
      %v1098 = vadd.f32 %v990, %v1097
      %v1099 = vpop.f32.mrb[0].mxu0
      %1100 = vmatprep.mubr.bf16.mxu0 0
      %1101 = vmatmul.mubr.bf16.gmra.mrb[0].mxu0 %v1011
      %v1102 = vpop.f32.mrb[0].mxu0
      %v1103 = vadd.f32 %v990, %v1102
      %v1104 = vpop.f32.mrb[0].mxu0
      %v1105 = vpop.f32.mrb[0].mxu0
      %v1106 = vadd.f32 %v990, %v1105
      %v1107 = vpop.f32.mrb[0].mxu0
      %1108 = vmatprep.mubr.bf16.mxu0 0
      %1109 = vmatmul.mubr.bf16.gmra.mrb[0].mxu0 %v1014
      %v1110 = vpop.f32.mrb[0].mxu0
      %v1111 = vadd.f32 %v990, %v1110
      %v1112 = vpop.f32.mrb[0].mxu0
      %v1113 = vpop.f32.mrb[0].mxu0
      %v1114 = vadd.f32 %v990, %v1113
      %v1115 = vpop.f32.mrb[0].mxu0
      %1116 = vmatprep.mubr.bf16.mxu0 0
      %1117 = vmatmul.mubr.bf16.gmra.mrb[0].mxu0 %v1017
      %v1118 = vpop.f32.mrb[0].mxu0
      %v1119 = vadd.f32 %v990, %v1118
      %v1120 = vpop.f32.mrb[0].mxu0
      %v1121 = vpop.f32.mrb[0].mxu0
      %v1122 = vadd.f32 %v990, %v1121
      %v1123 = vpop.f32.mrb[0].mxu0
      %1124 = vmatprep.mubr.bf16.mxu0 0
      %1125 = vmatmul.mubr.bf16.gmra.mrb[0].mxu0 %v1020
      %v1126 = vpop.f32.mrb[0].mxu0
      %v1127 = vadd.f32 %v990, %v1126
      %v1128 = vpop.f32.mrb[0].mxu0
      %v1129 = vpop.f32.mrb[0].mxu0
      %v1130 = vadd.f32 %v990, %v1129
      %v1131 = vpop.f32.mrb[0].mxu0
      %1132 = vmatprep.mubr.bf16.mxu0 0
      %1133 = vmatmul.mubr.bf16.gmra.mrb[0].mxu0 %v1023
      %v1134 = vpop.f32.mrb[0].mxu0
      %v1135 = vadd.f32 %v990, %v1134
      %v1136 = vpop.f32.mrb[0].mxu0
      %v1137 = vpop.f32.mrb[0].mxu0
      %v1138 = vadd.f32 %v990, %v1137
      %v1139 = vpop.f32.mrb[0].mxu0
      %1140 = vmatprep.mubr.bf16.mxu0 0
      %1141 = vmatmul.mubr.bf16.gmra.mrb[0].mxu0 %v1026
      %v1142 = vpop.f32.mrb[0].mxu0
      %v1143 = vadd.f32 %v990, %v1142
      %v1144 = vpop.f32.mrb[0].mxu0
      %v1145 = vpop.f32.mrb[0].mxu0
      %v1146 = vadd.f32 %v990, %v1145
      %v1147 = vpop.f32.mrb[0].mxu0
      %1148 = vmatprep.mubr.bf16.mxu0 0
      %1149 = vmatmul.mubr.bf16.gmra.mrb[0].mxu0 %v1029
      %v1150 = vpop.f32.mrb[0].mxu0
      %v1151 = vadd.f32 %v990, %v1150
      %v1152 = vpop.f32.mrb[0].mxu0
      %v1153 = vpop.f32.mrb[0].mxu0
      %v1154 = vadd.f32 %v990, %v1153
      %v1155 = vpop.f32.mrb[0].mxu0
      %1156 = vmatprep.mubr.bf16.mxu0 0
      %1157 = vmatmul.mubr.bf16.gmra.mrb[0].mxu0 %v1032
      %v1158 = vpop.f32.mrb[0].mxu0
      %v1159 = vadd.f32 %v990, %v1158
      %v1160 = vpop.f32.mrb[0].mxu0
      %v1161 = vpop.f32.mrb[0].mxu0
      %v1162 = vadd.f32 %v990, %v1161
      %v1163 = vpop.f32.mrb[0].mxu0
      %1164 = vmatprep.mubr.bf16.mxu0 0
      %1165 = vmatmul.mubr.bf16.gmra.mrb[0].mxu0 %v1035
      %v1166 = vpop.f32.mrb[0].mxu0
      %v1167 = vadd.f32 %v990, %v1166
      %v1168 = vpop.f32.mrb[0].mxu0
      %v1169 = vpop.f32.mrb[0].mxu0
      %v1170 = vadd.f32 %v990, %v1169
      %v1171 = vpop.f32.mrb[0].mxu0
      %1172 = vmatprep.mubr.bf16.mxu0 0
      %1173 = vmatmul.mubr.bf16.gmra.mrb[0].mxu0 %v1038
      %v1174 = vpop.f32.mrb[0].mxu0
      %v1175 = vadd.f32 %v990, %v1174
      %v1176 = vpop.f32.mrb[0].mxu0
      %v1177 = vpop.f32.mrb[0].mxu0
      %v1178 = vadd.f32 %v990, %v1177
      %v1179 = vpop.f32.mrb[0].mxu0
      %1180 = vmatprep.mubr.bf16.mxu0 0
      %1181 = vmatmul.mubr.bf16.gmra.mrb[0].mxu0 %v1041
      %v1182 = vpop.f32.mrb[0].mxu0
      %v1183 = vadd.f32 %v990, %v1182
      %v1184 = vpop.f32.mrb[0].mxu0
      %v1185 = vpop.f32.mrb[0].mxu0
      %v1186 = vadd.f32 %v990, %v1185
      %v1187 = vpop.f32.mrb[0].mxu0
      %1188 = vmatprep.mubr.bf16.mxu0 0
      %1189 = vmatmul.mubr.bf16.gmra.mrb[0].mxu0 %v1044
      %v1190 = vpop.f32.mrb[0].mxu0
      %v1191 = vadd.f32 %v990, %v1190
      %v1192 = vpop.f32.mrb[0].mxu0
      %v1193 = vpop.f32.mrb[0].mxu0
      %v1194 = vadd.f32 %v990, %v1193
      %v1195 = vpop.f32.mrb[0].mxu0
      %1196 = vmatprep.mubr.bf16.mxu0 0
      %1197 = vmatmul.mubr.bf16.gmra.mrb[0].mxu0 %v1047
      %v1198 = vpop.f32.mrb[0].mxu0
      %v1199 = vadd.f32 %v990, %v1198
      %v1200 = vpop.f32.mrb[0].mxu0
      %v1201 = vpop.f32.mrb[0].mxu0
      %v1202 = vadd.f32 %v990, %v1201
      %v1203 = vpop.f32.mrb[0].mxu0
      %1204 = vmatprep.mubr.bf16.mxu0 0
      %1205 = vmatmul.mubr.bf16.gmra.mrb[0].mxu0 %v1050
      %v1206 = vpop.f32.mrb[0].mxu0
      %v1207 = vadd.f32 %v990, %v1206
      %v1208 = vpop.f32.mrb[0].mxu0
      %v1209 = vpop.f32.mrb[0].mxu0
      %v1210 = vadd.f32 %v990, %v1209
      %v1211 = vpop.f32.mrb[0].mxu0
      %1212 = vdwg.mxu0
      %v1213 = vmax.f32 %v1087, 0.0
      %v1214 = vmax.f32 %v1090, 0.0
      %v1215 = vmax.f32 %v1095, 0.0
      %v1216 = vmax.f32 %v1098, 0.0
      %v1217 = vmax.f32 %v1103, 0.0
      %v1218 = vmax.f32 %v1106, 0.0
      %v1219 = vmax.f32 %v1111, 0.0
      %v1220 = vmax.f32 %v1114, 0.0
      %v1221 = vmax.f32 %v1119, 0.0
      %v1222 = vmax.f32 %v1122, 0.0
      %v1223 = vmax.f32 %v1127, 0.0
      %v1224 = vmax.f32 %v1130, 0.0
      %v1225 = vmax.f32 %v1135, 0.0
      %v1226 = vmax.f32 %v1138, 0.0
      %v1227 = vmax.f32 %v1143, 0.0
      %v1228 = vmax.f32 %v1146, 0.0
      %v1229 = vmax.f32 %v1151, 0.0
      %v1230 = vmax.f32 %v1154, 0.0
      %v1231 = vmax.f32 %v1159, 0.0
      %v1232 = vmax.f32 %v1162, 0.0
      %v1233 = vmax.f32 %v1167, 0.0
      %v1234 = vmax.f32 %v1170, 0.0
      %v1235 = vmax.f32 %v1175, 0.0
      %v1236 = vmax.f32 %v1178, 0.0
      %v1237 = vmax.f32 %v1183, 0.0
      %v1238 = vmax.f32 %v1186, 0.0
      %v1239 = vmax.f32 %v1191, 0.0
      %v1240 = vmax.f32 %v1194, 0.0
      %v1241 = vmax.f32 %v1199, 0.0
      %v1242 = vmax.f32 %v1202, 0.0
      %v1243 = vmax.f32 %v1207, 0.0
      %v1244 = vmax.f32 %v1210, 0.0
      %1245 = vmatprep.subr.bf16.mxu0 0
      %1246 = vmatpush1.bf16.msra.mxu0 %v963
      %1247 = vmatprep.subr.bf16.mxu0 0
      %1248 = vmatpush1.bf16.msra.mxu0 %v964
      %1249 = vmatprep.subr.bf16.mxu0 0
      %1250 = vmatpush1.bf16.msra.mxu0 %v965
      %1251 = vmatprep.subr.bf16.mxu0 0
      %1252 = vmatpush1.bf16.msra.mxu0 %v966
      %1253 = vmatprep.subr.bf16.mxu0 0
      %1254 = vmatpush1.bf16.msra.mxu0 %v967
      %1255 = vmatprep.subr.bf16.mxu0 0
      %1256 = vmatpush1.bf16.msra.mxu0 %v968
      %1257 = vmatprep.subr.bf16.mxu0 0
      %1258 = vmatpush1.bf16.msra.mxu0 %v969
      %1259 = vmatprep.subr.bf16.mxu0 0
      %1260 = vmatpush1.bf16.msra.mxu0 %v970
      %1261 = vmatprep.subr.bf16.mxu0 0
      %1262 = vmatpush1.bf16.msra.mxu0 %v971
      %1263 = vmatprep.subr.bf16.mxu0 0
      %1264 = vmatpush1.bf16.msra.mxu0 %v972
      %1265 = vmatprep.subr.bf16.mxu0 0
      %1266 = vmatpush1.bf16.msra.mxu0 %v973
      %1267 = vmatprep.subr.bf16.mxu0 0
      %1268 = vmatpush1.bf16.msra.mxu0 %v974
      %1269 = vmatprep.subr.bf16.mxu0 0
      %1270 = vmatpush1.bf16.msra.mxu0 %v975
      %1271 = vmatprep.subr.bf16.mxu0 0
      %1272 = vmatpush1.bf16.msra.mxu0 %v976
      %1273 = vmatprep.subr.bf16.mxu0 0
      %1274 = vmatpush1.bf16.msra.mxu0 %v977
      %1275 = vmatprep.subr.bf16.mxu0 0
      %1276 = vmatpush1.bf16.msra.mxu0 %v978
      %1277 = vmatprep.mubr.bf16.mxu0 %v458
      %1278 = vmatmul.mubr.bf16.gmra.mrb[0].mxu0 %v457
      %v1279 = vpop.f32.mrb[0].mxu0
      %v1280 = vadd.f32 0.0, %v1279
      %v1281 = vpop.f32.mrb[0].mxu0
      %v1282 = vpop.f32.mrb[0].mxu0
      %v1283 = vadd.f32 0.0, %v1282
      %v1284 = vpop.f32.mrb[0].mxu0
      %1285 = vmatprep.mubr.bf16.mxu0 %v460
      %1286 = vmatmul.mubr.bf16.gmra.mrb[0].mxu0 %v459
      %v1287 = vpop.f32.mrb[0].mxu0
      %v1288 = vadd.f32 0.0, %v1287
      %v1289 = vpop.f32.mrb[0].mxu0
      %v1290 = vpop.f32.mrb[0].mxu0
      %v1291 = vadd.f32 0.0, %v1290
      %v1292 = vpop.f32.mrb[0].mxu0
      %1293 = vmatprep.mubr.bf16.mxu0 %v462
      %1294 = vmatmul.mubr.bf16.gmra.mrb[0].mxu0 %v461
      %v1295 = vpop.f32.mrb[0].mxu0
      %v1296 = vadd.f32 0.0, %v1295
      %v1297 = vpop.f32.mrb[0].mxu0
      %v1298 = vpop.f32.mrb[0].mxu0
      %v1299 = vadd.f32 0.0, %v1298
      %v1300 = vpop.f32.mrb[0].mxu0
      %1301 = vmatprep.mubr.bf16.mxu0 %v464
      %1302 = vmatmul.mubr.bf16.gmra.mrb[0].mxu0 %v463
      %v1303 = vpop.f32.mrb[0].mxu0
      %v1304 = vadd.f32 0.0, %v1303
      %v1305 = vpop.f32.mrb[0].mxu0
      %v1306 = vpop.f32.mrb[0].mxu0
      %v1307 = vadd.f32 0.0, %v1306
      %v1308 = vpop.f32.mrb[0].mxu0
      %1309 = vmatprep.mubr.bf16.mxu0 %v466
      %1310 = vmatmul.mubr.bf16.gmra.mrb[0].mxu0 %v465
      %v1311 = vpop.f32.mrb[0].mxu0
      %v1312 = vadd.f32 0.0, %v1311
      %v1313 = vpop.f32.mrb[0].mxu0
      %v1314 = vpop.f32.mrb[0].mxu0
      %v1315 = vadd.f32 0.0, %v1314
      %v1316 = vpop.f32.mrb[0].mxu0
      %1317 = vmatprep.mubr.bf16.mxu0 %v468
      %1318 = vmatmul.mubr.bf16.gmra.mrb[0].mxu0 %v467
      %v1319 = vpop.f32.mrb[0].mxu0
      %v1320 = vadd.f32 0.0, %v1319
      %v1321 = vpop.f32.mrb[0].mxu0
      %v1322 = vpop.f32.mrb[0].mxu0
      %v1323 = vadd.f32 0.0, %v1322
      %v1324 = vpop.f32.mrb[0].mxu0
      %1325 = vmatprep.mubr.bf16.mxu0 %v470
      %1326 = vmatmul.mubr.bf16.gmra.mrb[0].mxu0 %v469
      %v1327 = vpop.f32.mrb[0].mxu0
      %v1328 = vadd.f32 0.0, %v1327
      %v1329 = vpop.f32.mrb[0].mxu0
      %v1330 = vpop.f32.mrb[0].mxu0
      %v1331 = vadd.f32 0.0, %v1330
      %v1332 = vpop.f32.mrb[0].mxu0
      %1333 = vmatprep.mubr.bf16.mxu0 %v472
      %1334 = vmatmul.mubr.bf16.gmra.mrb[0].mxu0 %v471
      %v1335 = vpop.f32.mrb[0].mxu0
      %v1336 = vadd.f32 0.0, %v1335
      %v1337 = vpop.f32.mrb[0].mxu0
      %v1338 = vpop.f32.mrb[0].mxu0
      %v1339 = vadd.f32 0.0, %v1338
      %v1340 = vpop.f32.mrb[0].mxu0
      %1341 = vmatprep.mubr.bf16.mxu0 %v474
      %1342 = vmatmul.mubr.bf16.gmra.mrb[0].mxu0 %v473
      %v1343 = vpop.f32.mrb[0].mxu0
      %v1344 = vadd.f32 0.0, %v1343
      %v1345 = vpop.f32.mrb[0].mxu0
      %v1346 = vpop.f32.mrb[0].mxu0
      %v1347 = vadd.f32 0.0, %v1346
      %v1348 = vpop.f32.mrb[0].mxu0
      %1349 = vmatprep.mubr.bf16.mxu0 %v476
      %1350 = vmatmul.mubr.bf16.gmra.mrb[0].mxu0 %v475
      %v1351 = vpop.f32.mrb[0].mxu0
      %v1352 = vadd.f32 0.0, %v1351
      %v1353 = vpop.f32.mrb[0].mxu0
      %v1354 = vpop.f32.mrb[0].mxu0
      %v1355 = vadd.f32 0.0, %v1354
      %v1356 = vpop.f32.mrb[0].mxu0
      %1357 = vmatprep.mubr.bf16.mxu0 %v478
      %1358 = vmatmul.mubr.bf16.gmra.mrb[0].mxu0 %v477
      %v1359 = vpop.f32.mrb[0].mxu0
      %v1360 = vadd.f32 0.0, %v1359
      %v1361 = vpop.f32.mrb[0].mxu0
      %v1362 = vpop.f32.mrb[0].mxu0
      %v1363 = vadd.f32 0.0, %v1362
      %v1364 = vpop.f32.mrb[0].mxu0
      %1365 = vmatprep.mubr.bf16.mxu0 %v480
      %1366 = vmatmul.mubr.bf16.gmra.mrb[0].mxu0 %v479
      %v1367 = vpop.f32.mrb[0].mxu0
      %v1368 = vadd.f32 0.0, %v1367
      %v1369 = vpop.f32.mrb[0].mxu0
      %v1370 = vpop.f32.mrb[0].mxu0
      %v1371 = vadd.f32 0.0, %v1370
      %v1372 = vpop.f32.mrb[0].mxu0
      %1373 = vmatprep.mubr.bf16.mxu0 %v482
      %1374 = vmatmul.mubr.bf16.gmra.mrb[0].mxu0 %v481
      %v1375 = vpop.f32.mrb[0].mxu0
      %v1376 = vadd.f32 0.0, %v1375
      %v1377 = vpop.f32.mrb[0].mxu0
      %v1378 = vpop.f32.mrb[0].mxu0
      %v1379 = vadd.f32 0.0, %v1378
      %v1380 = vpop.f32.mrb[0].mxu0
      %1381 = vmatprep.mubr.bf16.mxu0 %v484
      %1382 = vmatmul.mubr.bf16.gmra.mrb[0].mxu0 %v483
      %v1383 = vpop.f32.mrb[0].mxu0
      %v1384 = vadd.f32 0.0, %v1383
      %v1385 = vpop.f32.mrb[0].mxu0
      %v1386 = vpop.f32.mrb[0].mxu0
      %v1387 = vadd.f32 0.0, %v1386
      %v1388 = vpop.f32.mrb[0].mxu0
      %1389 = vmatprep.mubr.bf16.mxu0 %v486
      %1390 = vmatmul.mubr.bf16.gmra.mrb[0].mxu0 %v485
      %v1391 = vpop.f32.mrb[0].mxu0
      %v1392 = vadd.f32 0.0, %v1391
      %v1393 = vpop.f32.mrb[0].mxu0
      %v1394 = vpop.f32.mrb[0].mxu0
      %v1395 = vadd.f32 0.0, %v1394
      %v1396 = vpop.f32.mrb[0].mxu0
      %1397 = vmatprep.mubr.bf16.mxu0 %v488
      %1398 = vmatmul.mubr.bf16.gmra.mrb[0].mxu0 %v487
      %v1399 = vpop.f32.mrb[0].mxu0
      %v1400 = vadd.f32 0.0, %v1399
      %v1401 = vpop.f32.mrb[0].mxu0
      %v1402 = vpop.f32.mrb[0].mxu0
      %v1403 = vadd.f32 0.0, %v1402
      %v1404 = vpop.f32.mrb[0].mxu0
      %1405 = vdwg.mxu0
      %v1406 = vpack.c.bf16 %v1283, %v1280
      %v1407 = vpack.c.bf16 %v1291, %v1288
      %v1408 = vpack.c.bf16 %v1299, %v1296
      %v1409 = vpack.c.bf16 %v1307, %v1304
      %v1410 = vpack.c.bf16 %v1315, %v1312
      %v1411 = vpack.c.bf16 %v1323, %v1320
      %v1412 = vpack.c.bf16 %v1331, %v1328
      %v1413 = vpack.c.bf16 %v1339, %v1336
      %v1414 = vpack.c.bf16 %v1347, %v1344
      %v1415 = vpack.c.bf16 %v1355, %v1352
      %v1416 = vpack.c.bf16 %v1363, %v1360
      %v1417 = vpack.c.bf16 %v1371, %v1368
      %v1418 = vpack.c.bf16 %v1379, %v1376
      %v1419 = vpack.c.bf16 %v1387, %v1384
      %v1420 = vpack.c.bf16 %v1395, %v1392
      %v1421 = vpack.c.bf16 %v1403, %v1400
      %s1422 = scalar_lea.vmem %s2, 32
      %v1423 = vld [vmem:[%s1422] sm:$0xf]
      %v1424 = vld [vmem:[%s1422 + $0x4] sm:$0xf]
      %v1425 = vld [vmem:[%s1422 + $0x8] sm:$0xf]
      %v1426 = vld [vmem:[%s1422 + $0xc] sm:$0xf]
      %s1427 = scalar_lea.vmem %s3, 2
      %v1428 = vld [vmem:[%s1427] sm:$0x1]
      %v1430 = vlaneseq
      %v1431 = vshrl.u32 %v1430, 7
      %v1432 = vsub.s32 0, %v1431
      %v1433 = vrot.slane %v1428, %v1432
      %v1439 = vunpack.c.l.b16 %v1423
      %v1440 = vunpack.c.l.b16 %v1424
      %v1441 = vunpack.c.l.b16 %v1425
      %v1442 = vunpack.c.l.b16 %v1426
      %v1443 = vpack.c.b16 %v1440, %v1439
      %v1444 = vpack.c.b16 %v1442, %v1441
      %v1448 = vsel %vm721, %v1406, 0
      %v1451 = vsel %vm721, %v1407, 0
      %v1454 = vsel %vm721, %v1408, 0
      %v1457 = vsel %vm721, %v1409, 0
      %v1460 = vsel %vm721, %v1410, 0
      %v1463 = vsel %vm721, %v1411, 0
      %v1466 = vsel %vm721, %v1412, 0
      %v1469 = vsel %vm721, %v1413, 0
      %v1472 = vsel %vm721, %v1414, 0
      %v1475 = vsel %vm721, %v1415, 0
      %v1478 = vsel %vm721, %v1416, 0
      %v1481 = vsel %vm721, %v1417, 0
      %v1484 = vsel %vm721, %v1418, 0
      %v1487 = vsel %vm721, %v1419, 0
      %v1490 = vsel %vm721, %v1420, 0
      %v1493 = vsel %vm721, %v1421, 0
      %1495 = vmatprep.subr.bf16.mxu0 0
      %1496 = vmatpush1.bf16.msra.mxu0 %v1443
      %1497 = vmatprep.subr.bf16.mxu0 0
      %1498 = vmatpush1.bf16.msra.mxu0 %v1444
      %1499 = vmatprep.subr.bf16.mxu0 0
      %1500 = vmatpush1.bf16.msra.mxu0 0
      %1501 = vmatprep.subr.bf16.mxu0 0
      %1502 = vmatpush1.bf16.msra.mxu0 0
      %1503 = vmatprep.subr.bf16.mxu0 0
      %1504 = vmatpush1.bf16.msra.mxu0 0
      %1505 = vmatprep.subr.bf16.mxu0 0
      %1506 = vmatpush1.bf16.msra.mxu0 0
      %1507 = vmatprep.subr.bf16.mxu0 0
      %1508 = vmatpush1.bf16.msra.mxu0 0
      %1509 = vmatprep.subr.bf16.mxu0 0
      %1510 = vmatpush1.bf16.msra.mxu0 0
      %1511 = vmatprep.subr.bf16.mxu0 0
      %1512 = vmatpush1.bf16.msra.mxu0 0
      %1513 = vmatprep.subr.bf16.mxu0 0
      %1514 = vmatpush1.bf16.msra.mxu0 0
      %1515 = vmatprep.subr.bf16.mxu0 0
      %1516 = vmatpush1.bf16.msra.mxu0 0
      %1517 = vmatprep.subr.bf16.mxu0 0
      %1518 = vmatpush1.bf16.msra.mxu0 0
      %1519 = vmatprep.subr.bf16.mxu0 0
      %1520 = vmatpush1.bf16.msra.mxu0 0
      %1521 = vmatprep.subr.bf16.mxu0 0
      %1522 = vmatpush1.bf16.msra.mxu0 0
      %1523 = vmatprep.subr.bf16.mxu0 0
      %1524 = vmatpush1.bf16.msra.mxu0 0
      %1525 = vmatprep.subr.bf16.mxu0 0
      %1526 = vmatpush1.bf16.msra.mxu0 0
      %1527 = vmatprep.mubr.bf16.mxu0 0
      %1528 = vmatmul.mubr.bf16.gmra.mrb[0].mxu0 %v1448
      %v1529 = vpop.f32.mrb[0].mxu0
      %v1530 = vadd.f32 %v1433, %v1529
      %v1531 = vpop.f32.mrb[0].mxu0
      %v1532 = vpop.f32.mrb[0].mxu0
      %v1533 = vadd.f32 %v1433, %v1532
      %v1534 = vpop.f32.mrb[0].mxu0
      %1535 = vmatprep.mubr.bf16.mxu0 0
      %1536 = vmatmul.mubr.bf16.gmra.mrb[0].mxu0 %v1451
      %v1537 = vpop.f32.mrb[0].mxu0
      %v1538 = vadd.f32 %v1433, %v1537
      %v1539 = vpop.f32.mrb[0].mxu0
      %v1540 = vpop.f32.mrb[0].mxu0
      %v1541 = vadd.f32 %v1433, %v1540
      %v1542 = vpop.f32.mrb[0].mxu0
      %1543 = vmatprep.mubr.bf16.mxu0 0
      %1544 = vmatmul.mubr.bf16.gmra.mrb[0].mxu0 %v1454
      %v1545 = vpop.f32.mrb[0].mxu0
      %v1546 = vadd.f32 %v1433, %v1545
      %v1547 = vpop.f32.mrb[0].mxu0
      %v1548 = vpop.f32.mrb[0].mxu0
      %v1549 = vadd.f32 %v1433, %v1548
      %v1550 = vpop.f32.mrb[0].mxu0
      %1551 = vmatprep.mubr.bf16.mxu0 0
      %1552 = vmatmul.mubr.bf16.gmra.mrb[0].mxu0 %v1457
      %v1553 = vpop.f32.mrb[0].mxu0
      %v1554 = vadd.f32 %v1433, %v1553
      %v1555 = vpop.f32.mrb[0].mxu0
      %v1556 = vpop.f32.mrb[0].mxu0
      %v1557 = vadd.f32 %v1433, %v1556
      %v1558 = vpop.f32.mrb[0].mxu0
      %1559 = vmatprep.mubr.bf16.mxu0 0
      %1560 = vmatmul.mubr.bf16.gmra.mrb[0].mxu0 %v1460
      %v1561 = vpop.f32.mrb[0].mxu0
      %v1562 = vadd.f32 %v1433, %v1561
      %v1563 = vpop.f32.mrb[0].mxu0
      %v1564 = vpop.f32.mrb[0].mxu0
      %v1565 = vadd.f32 %v1433, %v1564
      %v1566 = vpop.f32.mrb[0].mxu0
      %1567 = vmatprep.mubr.bf16.mxu0 0
      %1568 = vmatmul.mubr.bf16.gmra.mrb[0].mxu0 %v1463
      %v1569 = vpop.f32.mrb[0].mxu0
      %v1570 = vadd.f32 %v1433, %v1569
      %v1571 = vpop.f32.mrb[0].mxu0
      %v1572 = vpop.f32.mrb[0].mxu0
      %v1573 = vadd.f32 %v1433, %v1572
      %v1574 = vpop.f32.mrb[0].mxu0
      %1575 = vmatprep.mubr.bf16.mxu0 0
      %1576 = vmatmul.mubr.bf16.gmra.mrb[0].mxu0 %v1466
      %v1577 = vpop.f32.mrb[0].mxu0
      %v1578 = vadd.f32 %v1433, %v1577
      %v1579 = vpop.f32.mrb[0].mxu0
      %v1580 = vpop.f32.mrb[0].mxu0
      %v1581 = vadd.f32 %v1433, %v1580
      %v1582 = vpop.f32.mrb[0].mxu0
      %1583 = vmatprep.mubr.bf16.mxu0 0
      %1584 = vmatmul.mubr.bf16.gmra.mrb[0].mxu0 %v1469
      %v1585 = vpop.f32.mrb[0].mxu0
      %v1586 = vadd.f32 %v1433, %v1585
      %v1587 = vpop.f32.mrb[0].mxu0
      %v1588 = vpop.f32.mrb[0].mxu0
      %v1589 = vadd.f32 %v1433, %v1588
      %v1590 = vpop.f32.mrb[0].mxu0
      %1591 = vmatprep.mubr.bf16.mxu0 0
      %1592 = vmatmul.mubr.bf16.gmra.mrb[0].mxu0 %v1472
      %v1593 = vpop.f32.mrb[0].mxu0
      %v1594 = vadd.f32 %v1433, %v1593
      %v1595 = vpop.f32.mrb[0].mxu0
      %v1596 = vpop.f32.mrb[0].mxu0
      %v1597 = vadd.f32 %v1433, %v1596
      %v1598 = vpop.f32.mrb[0].mxu0
      %1599 = vmatprep.mubr.bf16.mxu0 0
      %1600 = vmatmul.mubr.bf16.gmra.mrb[0].mxu0 %v1475
      %v1601 = vpop.f32.mrb[0].mxu0
      %v1602 = vadd.f32 %v1433, %v1601
      %v1603 = vpop.f32.mrb[0].mxu0
      %v1604 = vpop.f32.mrb[0].mxu0
      %v1605 = vadd.f32 %v1433, %v1604
      %v1606 = vpop.f32.mrb[0].mxu0
      %1607 = vmatprep.mubr.bf16.mxu0 0
      %1608 = vmatmul.mubr.bf16.gmra.mrb[0].mxu0 %v1478
      %v1609 = vpop.f32.mrb[0].mxu0
      %v1610 = vadd.f32 %v1433, %v1609
      %v1611 = vpop.f32.mrb[0].mxu0
      %v1612 = vpop.f32.mrb[0].mxu0
      %v1613 = vadd.f32 %v1433, %v1612
      %v1614 = vpop.f32.mrb[0].mxu0
      %1615 = vmatprep.mubr.bf16.mxu0 0
      %1616 = vmatmul.mubr.bf16.gmra.mrb[0].mxu0 %v1481
      %v1617 = vpop.f32.mrb[0].mxu0
      %v1618 = vadd.f32 %v1433, %v1617
      %v1619 = vpop.f32.mrb[0].mxu0
      %v1620 = vpop.f32.mrb[0].mxu0
      %v1621 = vadd.f32 %v1433, %v1620
      %v1622 = vpop.f32.mrb[0].mxu0
      %1623 = vmatprep.mubr.bf16.mxu0 0
      %1624 = vmatmul.mubr.bf16.gmra.mrb[0].mxu0 %v1484
      %v1625 = vpop.f32.mrb[0].mxu0
      %v1626 = vadd.f32 %v1433, %v1625
      %v1627 = vpop.f32.mrb[0].mxu0
      %v1628 = vpop.f32.mrb[0].mxu0
      %v1629 = vadd.f32 %v1433, %v1628
      %v1630 = vpop.f32.mrb[0].mxu0
      %1631 = vmatprep.mubr.bf16.mxu0 0
      %1632 = vmatmul.mubr.bf16.gmra.mrb[0].mxu0 %v1487
      %v1633 = vpop.f32.mrb[0].mxu0
      %v1634 = vadd.f32 %v1433, %v1633
      %v1635 = vpop.f32.mrb[0].mxu0
      %v1636 = vpop.f32.mrb[0].mxu0
      %v1637 = vadd.f32 %v1433, %v1636
      %v1638 = vpop.f32.mrb[0].mxu0
      %1639 = vmatprep.mubr.bf16.mxu0 0
      %1640 = vmatmul.mubr.bf16.gmra.mrb[0].mxu0 %v1490
      %v1641 = vpop.f32.mrb[0].mxu0
      %v1642 = vadd.f32 %v1433, %v1641
      %v1643 = vpop.f32.mrb[0].mxu0
      %v1644 = vpop.f32.mrb[0].mxu0
      %v1645 = vadd.f32 %v1433, %v1644
      %v1646 = vpop.f32.mrb[0].mxu0
      %1647 = vmatprep.mubr.bf16.mxu0 0
      %1648 = vmatmul.mubr.bf16.gmra.mrb[0].mxu0 %v1493
      %v1649 = vpop.f32.mrb[0].mxu0
      %v1650 = vadd.f32 %v1433, %v1649
      %v1651 = vpop.f32.mrb[0].mxu0
      %v1652 = vpop.f32.mrb[0].mxu0
      %v1653 = vadd.f32 %v1433, %v1652
      %v1654 = vpop.f32.mrb[0].mxu0
      %1655 = vdwg.mxu0
      %v1656 = vmax.f32 %v1530, 0.0
      %v1657 = vmax.f32 %v1533, 0.0
      %v1658 = vmax.f32 %v1538, 0.0
      %v1659 = vmax.f32 %v1541, 0.0
      %v1660 = vmax.f32 %v1546, 0.0
      %v1661 = vmax.f32 %v1549, 0.0
      %v1662 = vmax.f32 %v1554, 0.0
      %v1663 = vmax.f32 %v1557, 0.0
      %v1664 = vmax.f32 %v1562, 0.0
      %v1665 = vmax.f32 %v1565, 0.0
      %v1666 = vmax.f32 %v1570, 0.0
      %v1667 = vmax.f32 %v1573, 0.0
      %v1668 = vmax.f32 %v1578, 0.0
      %v1669 = vmax.f32 %v1581, 0.0
      %v1670 = vmax.f32 %v1586, 0.0
      %v1671 = vmax.f32 %v1589, 0.0
      %v1672 = vmax.f32 %v1594, 0.0
      %v1673 = vmax.f32 %v1597, 0.0
      %v1674 = vmax.f32 %v1602, 0.0
      %v1675 = vmax.f32 %v1605, 0.0
      %v1676 = vmax.f32 %v1610, 0.0
      %v1677 = vmax.f32 %v1613, 0.0
      %v1678 = vmax.f32 %v1618, 0.0
      %v1679 = vmax.f32 %v1621, 0.0
      %v1680 = vmax.f32 %v1626, 0.0
      %v1681 = vmax.f32 %v1629, 0.0
      %v1682 = vmax.f32 %v1634, 0.0
      %v1683 = vmax.f32 %v1637, 0.0
      %v1684 = vmax.f32 %v1642, 0.0
      %v1685 = vmax.f32 %v1645, 0.0
      %v1686 = vmax.f32 %v1650, 0.0
      %v1687 = vmax.f32 %v1653, 0.0
      %v1688 = vadd.f32 %v1213, %v1656
      %v1689 = vadd.f32 %v1214, %v1657
      %v1690 = vadd.f32 %v1215, %v1658
      %v1691 = vadd.f32 %v1216, %v1659
      %v1692 = vadd.f32 %v1217, %v1660
      %v1693 = vadd.f32 %v1218, %v1661
      %v1694 = vadd.f32 %v1219, %v1662
      %v1695 = vadd.f32 %v1220, %v1663
      %v1696 = vadd.f32 %v1221, %v1664
      %v1697 = vadd.f32 %v1222, %v1665
      %v1698 = vadd.f32 %v1223, %v1666
      %v1699 = vadd.f32 %v1224, %v1667
      %v1700 = vadd.f32 %v1225, %v1668
      %v1701 = vadd.f32 %v1226, %v1669
      %v1702 = vadd.f32 %v1227, %v1670
      %v1703 = vadd.f32 %v1228, %v1671
      %v1704 = vadd.f32 %v1229, %v1672
      %v1705 = vadd.f32 %v1230, %v1673
      %v1706 = vadd.f32 %v1231, %v1674
      %v1707 = vadd.f32 %v1232, %v1675
      %v1708 = vadd.f32 %v1233, %v1676
      %v1709 = vadd.f32 %v1234, %v1677
      %v1710 = vadd.f32 %v1235, %v1678
      %v1711 = vadd.f32 %v1236, %v1679
      %v1712 = vadd.f32 %v1237, %v1680
      %v1713 = vadd.f32 %v1238, %v1681
      %v1714 = vadd.f32 %v1239, %v1682
      %v1715 = vadd.f32 %v1240, %v1683
      %v1716 = vadd.f32 %v1241, %v1684
      %v1717 = vadd.f32 %v1242, %v1685
      %v1718 = vadd.f32 %v1243, %v1686
      %v1719 = vadd.f32 %v1244, %v1687
      %v1720 = vld [vmem:[%s4] sm:$0xf]
      %v1721 = vld [vmem:[%s4 + $0x4] sm:$0xf]
      %v1722 = vld [vmem:[%s4 + $0x8] sm:$0xf]
      %v1723 = vld [vmem:[%s4 + $0xc] sm:$0xf]
      %v1724 = vpack.c.bf16 %v1689, %v1688
      %v1725 = vpack.c.bf16 %v1691, %v1690
      %v1726 = vpack.c.bf16 %v1693, %v1692
      %v1727 = vpack.c.bf16 %v1695, %v1694
      %v1728 = vpack.c.bf16 %v1697, %v1696
      %v1729 = vpack.c.bf16 %v1699, %v1698
      %v1730 = vpack.c.bf16 %v1701, %v1700
      %v1731 = vpack.c.bf16 %v1703, %v1702
      %v1732 = vpack.c.bf16 %v1705, %v1704
      %v1733 = vpack.c.bf16 %v1707, %v1706
      %v1734 = vpack.c.bf16 %v1709, %v1708
      %v1735 = vpack.c.bf16 %v1711, %v1710
      %v1736 = vpack.c.bf16 %v1713, %v1712
      %v1737 = vpack.c.bf16 %v1715, %v1714
      %v1738 = vpack.c.bf16 %v1717, %v1716
      %v1739 = vpack.c.bf16 %v1719, %v1718
      %s1740 = scalar_lea.vmem %s4, 16
      %v1741 = vld [vmem:[%s1740] sm:$0xf]
      %v1742 = vld [vmem:[%s1740 + $0x4] sm:$0xf]
      %v1743 = vld [vmem:[%s1740 + $0x8] sm:$0xf]
      %v1744 = vld [vmem:[%s1740 + $0xc] sm:$0xf]
      %v1749 = vunpack.c.l.b16 %v1741
      %v1750 = vunpack.c.l.b16 %v1742
      %v1751 = vunpack.c.l.b16 %v1743
      %v1752 = vunpack.c.l.b16 %v1744
      %v1753 = vpack.c.b16 %v1750, %v1749
      %v1754 = vpack.c.b16 %v1752, %v1751
      %v1758 = vsel %vm721, %v1724, 0
      %v1761 = vsel %vm721, %v1725, 0
      %v1764 = vsel %vm721, %v1726, 0
      %v1767 = vsel %vm721, %v1727, 0
      %v1770 = vsel %vm721, %v1728, 0
      %v1773 = vsel %vm721, %v1729, 0
      %v1776 = vsel %vm721, %v1730, 0
      %v1779 = vsel %vm721, %v1731, 0
      %v1782 = vsel %vm721, %v1732, 0
      %v1785 = vsel %vm721, %v1733, 0
      %v1788 = vsel %vm721, %v1734, 0
      %v1791 = vsel %vm721, %v1735, 0
      %v1794 = vsel %vm721, %v1736, 0
      %v1797 = vsel %vm721, %v1737, 0
      %v1800 = vsel %vm721, %v1738, 0
      %v1803 = vsel %vm721, %v1739, 0
      %1805 = vmatprep.subr.bf16.mxu0 0
      %1806 = vmatpush1.bf16.msra.mxu0 %v1753
      %1807 = vmatprep.subr.bf16.mxu0 0
      %1808 = vmatpush1.bf16.msra.mxu0 %v1754
      %1809 = vmatprep.subr.bf16.mxu0 0
      %1810 = vmatpush1.bf16.msra.mxu0 0
      %1811 = vmatprep.subr.bf16.mxu0 0
      %1812 = vmatpush1.bf16.msra.mxu0 0
      %1813 = vmatprep.subr.bf16.mxu0 0
      %1814 = vmatpush1.bf16.msra.mxu0 0
      %1815 = vmatprep.subr.bf16.mxu0 0
      %1816 = vmatpush1.bf16.msra.mxu0 0
      %1817 = vmatprep.subr.bf16.mxu0 0
      %1818 = vmatpush1.bf16.msra.mxu0 0
      %1819 = vmatprep.subr.bf16.mxu0 0
      %1820 = vmatpush1.bf16.msra.mxu0 0
      %1821 = vmatprep.subr.bf16.mxu0 0
      %1822 = vmatpush1.bf16.msra.mxu0 0
      %1823 = vmatprep.subr.bf16.mxu0 0
      %1824 = vmatpush1.bf16.msra.mxu0 0
      %1825 = vmatprep.subr.bf16.mxu0 0
      %1826 = vmatpush1.bf16.msra.mxu0 0
      %1827 = vmatprep.subr.bf16.mxu0 0
      %1828 = vmatpush1.bf16.msra.mxu0 0
      %1829 = vmatprep.subr.bf16.mxu0 0
      %1830 = vmatpush1.bf16.msra.mxu0 0
      %1831 = vmatprep.subr.bf16.mxu0 0
      %1832 = vmatpush1.bf16.msra.mxu0 0
      %1833 = vmatprep.subr.bf16.mxu0 0
      %1834 = vmatpush1.bf16.msra.mxu0 0
      %1835 = vmatprep.subr.bf16.mxu0 0
      %1836 = vmatpush1.bf16.msra.mxu0 0
      %1837 = vmatprep.mubr.bf16.mxu0 0
      %1838 = vmatmul.mubr.bf16.gmra.mrb[0].mxu0 %v1758
      %v1839 = vpop.f32.mrb[0].mxu0
      %v1840 = vadd.f32 0.0, %v1839
      %v1841 = vpop.f32.mrb[0].mxu0
      %v1842 = vpop.f32.mrb[0].mxu0
      %v1843 = vadd.f32 0.0, %v1842
      %v1844 = vpop.f32.mrb[0].mxu0
      %1845 = vmatprep.mubr.bf16.mxu0 0
      %1846 = vmatmul.mubr.bf16.gmra.mrb[0].mxu0 %v1761
      %v1847 = vpop.f32.mrb[0].mxu0
      %v1848 = vadd.f32 0.0, %v1847
      %v1849 = vpop.f32.mrb[0].mxu0
      %v1850 = vpop.f32.mrb[0].mxu0
      %v1851 = vadd.f32 0.0, %v1850
      %v1852 = vpop.f32.mrb[0].mxu0
      %1853 = vmatprep.mubr.bf16.mxu0 0
      %1854 = vmatmul.mubr.bf16.gmra.mrb[0].mxu0 %v1764
      %v1855 = vpop.f32.mrb[0].mxu0
      %v1856 = vadd.f32 0.0, %v1855
      %v1857 = vpop.f32.mrb[0].mxu0
      %v1858 = vpop.f32.mrb[0].mxu0
      %v1859 = vadd.f32 0.0, %v1858
      %v1860 = vpop.f32.mrb[0].mxu0
      %1861 = vmatprep.mubr.bf16.mxu0 0
      %1862 = vmatmul.mubr.bf16.gmra.mrb[0].mxu0 %v1767
      %v1863 = vpop.f32.mrb[0].mxu0
      %v1864 = vadd.f32 0.0, %v1863
      %v1865 = vpop.f32.mrb[0].mxu0
      %v1866 = vpop.f32.mrb[0].mxu0
      %v1867 = vadd.f32 0.0, %v1866
      %v1868 = vpop.f32.mrb[0].mxu0
      %1869 = vmatprep.mubr.bf16.mxu0 0
      %1870 = vmatmul.mubr.bf16.gmra.mrb[0].mxu0 %v1770
      %v1871 = vpop.f32.mrb[0].mxu0
      %v1872 = vadd.f32 0.0, %v1871
      %v1873 = vpop.f32.mrb[0].mxu0
      %v1874 = vpop.f32.mrb[0].mxu0
      %v1875 = vadd.f32 0.0, %v1874
      %v1876 = vpop.f32.mrb[0].mxu0
      %1877 = vmatprep.mubr.bf16.mxu0 0
      %1878 = vmatmul.mubr.bf16.gmra.mrb[0].mxu0 %v1773
      %v1879 = vpop.f32.mrb[0].mxu0
      %v1880 = vadd.f32 0.0, %v1879
      %v1881 = vpop.f32.mrb[0].mxu0
      %v1882 = vpop.f32.mrb[0].mxu0
      %v1883 = vadd.f32 0.0, %v1882
      %v1884 = vpop.f32.mrb[0].mxu0
      %1885 = vmatprep.mubr.bf16.mxu0 0
      %1886 = vmatmul.mubr.bf16.gmra.mrb[0].mxu0 %v1776
      %v1887 = vpop.f32.mrb[0].mxu0
      %v1888 = vadd.f32 0.0, %v1887
      %v1889 = vpop.f32.mrb[0].mxu0
      %v1890 = vpop.f32.mrb[0].mxu0
      %v1891 = vadd.f32 0.0, %v1890
      %v1892 = vpop.f32.mrb[0].mxu0
      %1893 = vmatprep.mubr.bf16.mxu0 0
      %1894 = vmatmul.mubr.bf16.gmra.mrb[0].mxu0 %v1779
      %v1895 = vpop.f32.mrb[0].mxu0
      %v1896 = vadd.f32 0.0, %v1895
      %v1897 = vpop.f32.mrb[0].mxu0
      %v1898 = vpop.f32.mrb[0].mxu0
      %v1899 = vadd.f32 0.0, %v1898
      %v1900 = vpop.f32.mrb[0].mxu0
      %1901 = vmatprep.mubr.bf16.mxu0 0
      %1902 = vmatmul.mubr.bf16.gmra.mrb[0].mxu0 %v1782
      %v1903 = vpop.f32.mrb[0].mxu0
      %v1904 = vadd.f32 0.0, %v1903
      %v1905 = vpop.f32.mrb[0].mxu0
      %v1906 = vpop.f32.mrb[0].mxu0
      %v1907 = vadd.f32 0.0, %v1906
      %v1908 = vpop.f32.mrb[0].mxu0
      %1909 = vmatprep.mubr.bf16.mxu0 0
      %1910 = vmatmul.mubr.bf16.gmra.mrb[0].mxu0 %v1785
      %v1911 = vpop.f32.mrb[0].mxu0
      %v1912 = vadd.f32 0.0, %v1911
      %v1913 = vpop.f32.mrb[0].mxu0
      %v1914 = vpop.f32.mrb[0].mxu0
      %v1915 = vadd.f32 0.0, %v1914
      %v1916 = vpop.f32.mrb[0].mxu0
      %1917 = vmatprep.mubr.bf16.mxu0 0
      %1918 = vmatmul.mubr.bf16.gmra.mrb[0].mxu0 %v1788
      %v1919 = vpop.f32.mrb[0].mxu0
      %v1920 = vadd.f32 0.0, %v1919
      %v1921 = vpop.f32.mrb[0].mxu0
      %v1922 = vpop.f32.mrb[0].mxu0
      %v1923 = vadd.f32 0.0, %v1922
      %v1924 = vpop.f32.mrb[0].mxu0
      %1925 = vmatprep.mubr.bf16.mxu0 0
      %1926 = vmatmul.mubr.bf16.gmra.mrb[0].mxu0 %v1791
      %v1927 = vpop.f32.mrb[0].mxu0
      %v1928 = vadd.f32 0.0, %v1927
      %v1929 = vpop.f32.mrb[0].mxu0
      %v1930 = vpop.f32.mrb[0].mxu0
      %v1931 = vadd.f32 0.0, %v1930
      %v1932 = vpop.f32.mrb[0].mxu0
      %1933 = vmatprep.mubr.bf16.mxu0 0
      %1934 = vmatmul.mubr.bf16.gmra.mrb[0].mxu0 %v1794
      %v1935 = vpop.f32.mrb[0].mxu0
      %v1936 = vadd.f32 0.0, %v1935
      %v1937 = vpop.f32.mrb[0].mxu0
      %v1938 = vpop.f32.mrb[0].mxu0
      %v1939 = vadd.f32 0.0, %v1938
      %v1940 = vpop.f32.mrb[0].mxu0
      %1941 = vmatprep.mubr.bf16.mxu0 0
      %1942 = vmatmul.mubr.bf16.gmra.mrb[0].mxu0 %v1797
      %v1943 = vpop.f32.mrb[0].mxu0
      %v1944 = vadd.f32 0.0, %v1943
      %v1945 = vpop.f32.mrb[0].mxu0
      %v1946 = vpop.f32.mrb[0].mxu0
      %v1947 = vadd.f32 0.0, %v1946
      %v1948 = vpop.f32.mrb[0].mxu0
      %1949 = vmatprep.mubr.bf16.mxu0 0
      %1950 = vmatmul.mubr.bf16.gmra.mrb[0].mxu0 %v1800
      %v1951 = vpop.f32.mrb[0].mxu0
      %v1952 = vadd.f32 0.0, %v1951
      %v1953 = vpop.f32.mrb[0].mxu0
      %v1954 = vpop.f32.mrb[0].mxu0
      %v1955 = vadd.f32 0.0, %v1954
      %v1956 = vpop.f32.mrb[0].mxu0
      %1957 = vmatprep.mubr.bf16.mxu0 0
      %1958 = vmatmul.mubr.bf16.gmra.mrb[0].mxu0 %v1803
      %v1959 = vpop.f32.mrb[0].mxu0
      %v1960 = vadd.f32 0.0, %v1959
      %v1961 = vpop.f32.mrb[0].mxu0
      %v1962 = vpop.f32.mrb[0].mxu0
      %v1963 = vadd.f32 0.0, %v1962
      %v1964 = vpop.f32.mrb[0].mxu0
      %1965 = vdwg.mxu0
      %v1970 = vunpack.c.l.b16 %v1720
      %v1971 = vunpack.c.l.b16 %v1721
      %v1972 = vunpack.c.l.b16 %v1722
      %v1973 = vunpack.c.l.b16 %v1723
      %v1974 = vpack.c.b16 %v1971, %v1970
      %v1975 = vpack.c.b16 %v1973, %v1972
      %v1979 = vsel %vm721, %v963, 0
      %v1982 = vsel %vm721, %v964, 0
      %v1985 = vsel %vm721, %v965, 0
      %v1988 = vsel %vm721, %v966, 0
      %v1991 = vsel %vm721, %v967, 0
      %v1994 = vsel %vm721, %v968, 0
      %v1997 = vsel %vm721, %v969, 0
      %v2000 = vsel %vm721, %v970, 0
      %v2003 = vsel %vm721, %v971, 0
      %v2006 = vsel %vm721, %v972, 0
      %v2009 = vsel %vm721, %v973, 0
      %v2012 = vsel %vm721, %v974, 0
      %v2015 = vsel %vm721, %v975, 0
      %v2018 = vsel %vm721, %v976, 0
      %v2021 = vsel %vm721, %v977, 0
      %v2024 = vsel %vm721, %v978, 0
      %2026 = vmatprep.subr.bf16.mxu0 0
      %2027 = vmatpush1.bf16.msra.mxu0 %v1974
      %2028 = vmatprep.subr.bf16.mxu0 0
      %2029 = vmatpush1.bf16.msra.mxu0 %v1975
      %2030 = vmatprep.subr.bf16.mxu0 0
      %2031 = vmatpush1.bf16.msra.mxu0 0
      %2032 = vmatprep.subr.bf16.mxu0 0
      %2033 = vmatpush1.bf16.msra.mxu0 0
      %2034 = vmatprep.subr.bf16.mxu0 0
      %2035 = vmatpush1.bf16.msra.mxu0 0
      %2036 = vmatprep.subr.bf16.mxu0 0
      %2037 = vmatpush1.bf16.msra.mxu0 0
      %2038 = vmatprep.subr.bf16.mxu0 0
      %2039 = vmatpush1.bf16.msra.mxu0 0
      %2040 = vmatprep.subr.bf16.mxu0 0
      %2041 = vmatpush1.bf16.msra.mxu0 0
      %2042 = vmatprep.subr.bf16.mxu0 0
      %2043 = vmatpush1.bf16.msra.mxu0 0
      %2044 = vmatprep.subr.bf16.mxu0 0
      %2045 = vmatpush1.bf16.msra.mxu0 0
      %2046 = vmatprep.subr.bf16.mxu0 0
      %2047 = vmatpush1.bf16.msra.mxu0 0
      %2048 = vmatprep.subr.bf16.mxu0 0
      %2049 = vmatpush1.bf16.msra.mxu0 0
      %2050 = vmatprep.subr.bf16.mxu0 0
      %2051 = vmatpush1.bf16.msra.mxu0 0
      %2052 = vmatprep.subr.bf16.mxu0 0
      %2053 = vmatpush1.bf16.msra.mxu0 0
      %2054 = vmatprep.subr.bf16.mxu0 0
      %2055 = vmatpush1.bf16.msra.mxu0 0
      %2056 = vmatprep.subr.bf16.mxu0 0
      %2057 = vmatpush1.bf16.msra.mxu0 0
      %2058 = vmatprep.mubr.bf16.mxu0 0
      %2059 = vmatmul.mubr.bf16.gmra.mrb[0].mxu0 %v1979
      %v2060 = vpop.f32.mrb[0].mxu0
      %v2061 = vadd.f32 %v1840, %v2060
      %v2062 = vpop.f32.mrb[0].mxu0
      %v2063 = vpop.f32.mrb[0].mxu0
      %v2064 = vadd.f32 %v1843, %v2063
      %v2065 = vpop.f32.mrb[0].mxu0
      %2066 = vmatprep.mubr.bf16.mxu0 0
      %2067 = vmatmul.mubr.bf16.gmra.mrb[0].mxu0 %v1982
      %v2068 = vpop.f32.mrb[0].mxu0
      %v2069 = vadd.f32 %v1848, %v2068
      %v2070 = vpop.f32.mrb[0].mxu0
      %v2071 = vpop.f32.mrb[0].mxu0
      %v2072 = vadd.f32 %v1851, %v2071
      %v2073 = vpop.f32.mrb[0].mxu0
      %2074 = vmatprep.mubr.bf16.mxu0 0
      %2075 = vmatmul.mubr.bf16.gmra.mrb[0].mxu0 %v1985
      %v2076 = vpop.f32.mrb[0].mxu0
      %v2077 = vadd.f32 %v1856, %v2076
      %v2078 = vpop.f32.mrb[0].mxu0
      %v2079 = vpop.f32.mrb[0].mxu0
      %v2080 = vadd.f32 %v1859, %v2079
      %v2081 = vpop.f32.mrb[0].mxu0
      %2082 = vmatprep.mubr.bf16.mxu0 0
      %2083 = vmatmul.mubr.bf16.gmra.mrb[0].mxu0 %v1988
      %v2084 = vpop.f32.mrb[0].mxu0
      %v2085 = vadd.f32 %v1864, %v2084
      %v2086 = vpop.f32.mrb[0].mxu0
      %v2087 = vpop.f32.mrb[0].mxu0
      %v2088 = vadd.f32 %v1867, %v2087
      %v2089 = vpop.f32.mrb[0].mxu0
      %2090 = vmatprep.mubr.bf16.mxu0 0
      %2091 = vmatmul.mubr.bf16.gmra.mrb[0].mxu0 %v1991
      %v2092 = vpop.f32.mrb[0].mxu0
      %v2093 = vadd.f32 %v1872, %v2092
      %v2094 = vpop.f32.mrb[0].mxu0
      %v2095 = vpop.f32.mrb[0].mxu0
      %v2096 = vadd.f32 %v1875, %v2095
      %v2097 = vpop.f32.mrb[0].mxu0
      %2098 = vmatprep.mubr.bf16.mxu0 0
      %2099 = vmatmul.mubr.bf16.gmra.mrb[0].mxu0 %v1994
      %v2100 = vpop.f32.mrb[0].mxu0
      %v2101 = vadd.f32 %v1880, %v2100
      %v2102 = vpop.f32.mrb[0].mxu0
      %v2103 = vpop.f32.mrb[0].mxu0
      %v2104 = vadd.f32 %v1883, %v2103
      %v2105 = vpop.f32.mrb[0].mxu0
      %2106 = vmatprep.mubr.bf16.mxu0 0
      %2107 = vmatmul.mubr.bf16.gmra.mrb[0].mxu0 %v1997
      %v2108 = vpop.f32.mrb[0].mxu0
      %v2109 = vadd.f32 %v1888, %v2108
      %v2110 = vpop.f32.mrb[0].mxu0
      %v2111 = vpop.f32.mrb[0].mxu0
      %v2112 = vadd.f32 %v1891, %v2111
      %v2113 = vpop.f32.mrb[0].mxu0
      %2114 = vmatprep.mubr.bf16.mxu0 0
      %2115 = vmatmul.mubr.bf16.gmra.mrb[0].mxu0 %v2000
      %v2116 = vpop.f32.mrb[0].mxu0
      %v2117 = vadd.f32 %v1896, %v2116
      %v2118 = vpop.f32.mrb[0].mxu0
      %v2119 = vpop.f32.mrb[0].mxu0
      %v2120 = vadd.f32 %v1899, %v2119
      %v2121 = vpop.f32.mrb[0].mxu0
      %2122 = vmatprep.mubr.bf16.mxu0 0
      %2123 = vmatmul.mubr.bf16.gmra.mrb[0].mxu0 %v2003
      %v2124 = vpop.f32.mrb[0].mxu0
      %v2125 = vadd.f32 %v1904, %v2124
      %v2126 = vpop.f32.mrb[0].mxu0
      %v2127 = vpop.f32.mrb[0].mxu0
      %v2128 = vadd.f32 %v1907, %v2127
      %v2129 = vpop.f32.mrb[0].mxu0
      %2130 = vmatprep.mubr.bf16.mxu0 0
      %2131 = vmatmul.mubr.bf16.gmra.mrb[0].mxu0 %v2006
      %v2132 = vpop.f32.mrb[0].mxu0
      %v2133 = vadd.f32 %v1912, %v2132
      %v2134 = vpop.f32.mrb[0].mxu0
      %v2135 = vpop.f32.mrb[0].mxu0
      %v2136 = vadd.f32 %v1915, %v2135
      %v2137 = vpop.f32.mrb[0].mxu0
      %2138 = vmatprep.mubr.bf16.mxu0 0
      %2139 = vmatmul.mubr.bf16.gmra.mrb[0].mxu0 %v2009
      %v2140 = vpop.f32.mrb[0].mxu0
      %v2141 = vadd.f32 %v1920, %v2140
      %v2142 = vpop.f32.mrb[0].mxu0
      %v2143 = vpop.f32.mrb[0].mxu0
      %v2144 = vadd.f32 %v1923, %v2143
      %v2145 = vpop.f32.mrb[0].mxu0
      %2146 = vmatprep.mubr.bf16.mxu0 0
      %2147 = vmatmul.mubr.bf16.gmra.mrb[0].mxu0 %v2012
      %v2148 = vpop.f32.mrb[0].mxu0
      %v2149 = vadd.f32 %v1928, %v2148
      %v2150 = vpop.f32.mrb[0].mxu0
      %v2151 = vpop.f32.mrb[0].mxu0
      %v2152 = vadd.f32 %v1931, %v2151
      %v2153 = vpop.f32.mrb[0].mxu0
      %2154 = vmatprep.mubr.bf16.mxu0 0
      %2155 = vmatmul.mubr.bf16.gmra.mrb[0].mxu0 %v2015
      %v2156 = vpop.f32.mrb[0].mxu0
      %v2157 = vadd.f32 %v1936, %v2156
      %v2158 = vpop.f32.mrb[0].mxu0
      %v2159 = vpop.f32.mrb[0].mxu0
      %v2160 = vadd.f32 %v1939, %v2159
      %v2161 = vpop.f32.mrb[0].mxu0
      %2162 = vmatprep.mubr.bf16.mxu0 0
      %2163 = vmatmul.mubr.bf16.gmra.mrb[0].mxu0 %v2018
      %v2164 = vpop.f32.mrb[0].mxu0
      %v2165 = vadd.f32 %v1944, %v2164
      %v2166 = vpop.f32.mrb[0].mxu0
      %v2167 = vpop.f32.mrb[0].mxu0
      %v2168 = vadd.f32 %v1947, %v2167
      %v2169 = vpop.f32.mrb[0].mxu0
      %2170 = vmatprep.mubr.bf16.mxu0 0
      %2171 = vmatmul.mubr.bf16.gmra.mrb[0].mxu0 %v2021
      %v2172 = vpop.f32.mrb[0].mxu0
      %v2173 = vadd.f32 %v1952, %v2172
      %v2174 = vpop.f32.mrb[0].mxu0
      %v2175 = vpop.f32.mrb[0].mxu0
      %v2176 = vadd.f32 %v1955, %v2175
      %v2177 = vpop.f32.mrb[0].mxu0
      %2178 = vmatprep.mubr.bf16.mxu0 0
      %2179 = vmatmul.mubr.bf16.gmra.mrb[0].mxu0 %v2024
      %v2180 = vpop.f32.mrb[0].mxu0
      %v2181 = vadd.f32 %v1960, %v2180
      %v2182 = vpop.f32.mrb[0].mxu0
      %v2183 = vpop.f32.mrb[0].mxu0
      %v2184 = vadd.f32 %v1963, %v2183
      %v2185 = vpop.f32.mrb[0].mxu0
      %2186 = vdwg.mxu0
      %v2187 = vld [vmem:[%s5] sm:$0x1]
      %v2189 = vlaneseq
      %v2190 = vshrl.u32 %v2189, 7
      %v2191 = vsub.s32 0, %v2190
      %v2192 = vrot.slane %v2187, %v2191
      %v2194 = vadd.f32 %v2061, %v2192
      %v2195 = vadd.f32 %v2064, %v2192
      %v2196 = vadd.f32 %v2069, %v2192
      %v2197 = vadd.f32 %v2072, %v2192
      %v2198 = vadd.f32 %v2077, %v2192
      %v2199 = vadd.f32 %v2080, %v2192
      %v2200 = vadd.f32 %v2085, %v2192
      %v2201 = vadd.f32 %v2088, %v2192
      %v2202 = vadd.f32 %v2093, %v2192
      %v2203 = vadd.f32 %v2096, %v2192
      %v2204 = vadd.f32 %v2101, %v2192
      %v2205 = vadd.f32 %v2104, %v2192
      %v2206 = vadd.f32 %v2109, %v2192
      %v2207 = vadd.f32 %v2112, %v2192
      %v2208 = vadd.f32 %v2117, %v2192
      %v2209 = vadd.f32 %v2120, %v2192
      %v2210 = vadd.f32 %v2125, %v2192
      %v2211 = vadd.f32 %v2128, %v2192
      %v2212 = vadd.f32 %v2133, %v2192
      %v2213 = vadd.f32 %v2136, %v2192
      %v2214 = vadd.f32 %v2141, %v2192
      %v2215 = vadd.f32 %v2144, %v2192
      %v2216 = vadd.f32 %v2149, %v2192
      %v2217 = vadd.f32 %v2152, %v2192
      %v2218 = vadd.f32 %v2157, %v2192
      %v2219 = vadd.f32 %v2160, %v2192
      %v2220 = vadd.f32 %v2165, %v2192
      %v2221 = vadd.f32 %v2168, %v2192
      %v2222 = vadd.f32 %v2173, %v2192
      %v2223 = vadd.f32 %v2176, %v2192
      %v2224 = vadd.f32 %v2181, %v2192
      %v2225 = vadd.f32 %v2184, %v2192
      %v2226 = vmax.f32 %v2194, 0.0
      %v2227 = vmax.f32 %v2195, 0.0
      %v2228 = vmax.f32 %v2196, 0.0
      %v2229 = vmax.f32 %v2197, 0.0
      %v2230 = vmax.f32 %v2198, 0.0
      %v2231 = vmax.f32 %v2199, 0.0
      %v2232 = vmax.f32 %v2200, 0.0
      %v2233 = vmax.f32 %v2201, 0.0
      %v2234 = vmax.f32 %v2202, 0.0
      %v2235 = vmax.f32 %v2203, 0.0
      %v2236 = vmax.f32 %v2204, 0.0
      %v2237 = vmax.f32 %v2205, 0.0
      %v2238 = vmax.f32 %v2206, 0.0
      %v2239 = vmax.f32 %v2207, 0.0
      %v2240 = vmax.f32 %v2208, 0.0
      %v2241 = vmax.f32 %v2209, 0.0
      %v2242 = vmax.f32 %v2210, 0.0
      %v2243 = vmax.f32 %v2211, 0.0
      %v2244 = vmax.f32 %v2212, 0.0
      %v2245 = vmax.f32 %v2213, 0.0
      %v2246 = vmax.f32 %v2214, 0.0
      %v2247 = vmax.f32 %v2215, 0.0
      %v2248 = vmax.f32 %v2216, 0.0
      %v2249 = vmax.f32 %v2217, 0.0
      %v2250 = vmax.f32 %v2218, 0.0
      %v2251 = vmax.f32 %v2219, 0.0
      %v2252 = vmax.f32 %v2220, 0.0
      %v2253 = vmax.f32 %v2221, 0.0
      %v2254 = vmax.f32 %v2222, 0.0
      %v2255 = vmax.f32 %v2223, 0.0
      %v2256 = vmax.f32 %v2224, 0.0
      %v2257 = vmax.f32 %v2225, 0.0
      %v2258 = vadd.f32 %v313, %v2226
      %v2259 = vadd.f32 %v314, %v2227
      %v2260 = vadd.f32 %v315, %v2228
      %v2261 = vadd.f32 %v316, %v2229
      %v2262 = vadd.f32 %v317, %v2230
      %v2263 = vadd.f32 %v318, %v2231
      %v2264 = vadd.f32 %v319, %v2232
      %v2265 = vadd.f32 %v320, %v2233
      %v2266 = vadd.f32 %v321, %v2234
      %v2267 = vadd.f32 %v322, %v2235
      %v2268 = vadd.f32 %v323, %v2236
      %v2269 = vadd.f32 %v324, %v2237
      %v2270 = vadd.f32 %v325, %v2238
      %v2271 = vadd.f32 %v326, %v2239
      %v2272 = vadd.f32 %v327, %v2240
      %v2273 = vadd.f32 %v328, %v2241
      %v2274 = vadd.f32 %v329, %v2242
      %v2275 = vadd.f32 %v330, %v2243
      %v2276 = vadd.f32 %v331, %v2244
      %v2277 = vadd.f32 %v332, %v2245
      %v2278 = vadd.f32 %v333, %v2246
      %v2279 = vadd.f32 %v334, %v2247
      %v2280 = vadd.f32 %v335, %v2248
      %v2281 = vadd.f32 %v336, %v2249
      %v2282 = vadd.f32 %v337, %v2250
      %v2283 = vadd.f32 %v338, %v2251
      %v2284 = vadd.f32 %v339, %v2252
      %v2285 = vadd.f32 %v340, %v2253
      %v2286 = vadd.f32 %v341, %v2254
      %v2287 = vadd.f32 %v342, %v2255
      %v2288 = vadd.f32 %v343, %v2256
      %v2289 = vadd.f32 %v344, %v2257
      %2290 = vst.msk [vmem:[%s278] sm:$0xff] %vm721, %v2258
      %2291 = vst.msk [vmem:[%s278 + $0x8] sm:$0xff] %vm721, %v2259
      %2292 = vst.msk [vmem:[%s278 + $0x10] sm:$0xff] %vm721, %v2260
      %2293 = vst.msk [vmem:[%s278 + $0x18] sm:$0xff] %vm721, %v2261
      %2294 = vst.msk [vmem:[%s278 + $0x20] sm:$0xff] %vm721, %v2262
      %2295 = vst.msk [vmem:[%s278 + $0x28] sm:$0xff] %vm721, %v2263
      %2296 = vst.msk [vmem:[%s278 + $0x30] sm:$0xff] %vm721, %v2264
      %2297 = vst.msk [vmem:[%s278 + $0x38] sm:$0xff] %vm721, %v2265
      %2298 = vst.msk [vmem:[%s278 + $0x40] sm:$0xff] %vm721, %v2266
      %2299 = vst.msk [vmem:[%s278 + $0x48] sm:$0xff] %vm721, %v2267
      %2300 = vst.msk [vmem:[%s278 + $0x50] sm:$0xff] %vm721, %v2268
      %2301 = vst.msk [vmem:[%s278 + $0x58] sm:$0xff] %vm721, %v2269
      %2302 = vst.msk [vmem:[%s278 + $0x60] sm:$0xff] %vm721, %v2270
      %2303 = vst.msk [vmem:[%s278 + $0x68] sm:$0xff] %vm721, %v2271
      %2304 = vst.msk [vmem:[%s278 + $0x70] sm:$0xff] %vm721, %v2272
      %2305 = vst.msk [vmem:[%s278 + $0x78] sm:$0xff] %vm721, %v2273
      %2306 = vst.msk [vmem:[%s278 + $0x80] sm:$0xff] %vm721, %v2274
      %2307 = vst.msk [vmem:[%s278 + $0x88] sm:$0xff] %vm721, %v2275
      %2308 = vst.msk [vmem:[%s278 + $0x90] sm:$0xff] %vm721, %v2276
      %2309 = vst.msk [vmem:[%s278 + $0x98] sm:$0xff] %vm721, %v2277
      %2310 = vst.msk [vmem:[%s278 + $0xa0] sm:$0xff] %vm721, %v2278
      %2311 = vst.msk [vmem:[%s278 + $0xa8] sm:$0xff] %vm721, %v2279
      %2312 = vst.msk [vmem:[%s278 + $0xb0] sm:$0xff] %vm721, %v2280
      %2313 = vst.msk [vmem:[%s278 + $0xb8] sm:$0xff] %vm721, %v2281
      %2314 = vst.msk [vmem:[%s278 + $0xc0] sm:$0xff] %vm721, %v2282
      %2315 = vst.msk [vmem:[%s278 + $0xc8] sm:$0xff] %vm721, %v2283
      %2316 = vst.msk [vmem:[%s278 + $0xd0] sm:$0xff] %vm721, %v2284
      %2317 = vst.msk [vmem:[%s278 + $0xd8] sm:$0xff] %vm721, %v2285
      %2318 = vst.msk [vmem:[%s278 + $0xe0] sm:$0xff] %vm721, %v2286
      %2319 = vst.msk [vmem:[%s278 + $0xe8] sm:$0xff] %vm721, %v2287
      %2320 = vst.msk [vmem:[%s278 + $0xf0] sm:$0xff] %vm721, %v2288
      %2321 = vst.msk [vmem:[%s278 + $0xf8] sm:$0xff] %vm721, %v2289
      %s2322 = smul.u32 32, %s17
      %p2323 = scmp.lt.s32.totalorder %s2322, 63
      %s2324 = scalar_select %p2323, %s2322, 63
      %s2325 = smul.addr %s2324, 8
      %s2326 = scalar_lea.vmem %s6, %s2325
      // Predicated region
      $region45: #{tpu_custom_call.1} parent=43 // pred_check
        %p2327 = pneg %p171
      $region46: #{tpu_custom_call.1} parent=43 // pred_check_branch
        %2329 = sbr.rel (%p2327) target = $region48
      $region47: #{tpu_custom_call.1} parent=43 // pred_region
        %s2330 = smul.u32 32, %s17
      $region48: #{tpu_custom_call.1} parent=43 // pred_fallthru
        _
    $region44: #{tpu_custom_call.1} parent=5 // pred_fallthru
      _
    %p2331 = scmp.le.s32.totalorder 2, %s12
    // Predicated region
    $region49: #{tpu_custom_call.1} parent=5 // pred_check
      %p2332 = pneg %p2331
    $region50: #{tpu_custom_call.1} parent=5 // pred_check_branch
      %2334 = sbr.rel (%p2332) target = $region52
    $region51: #{tpu_custom_call.1} parent=5 // pred_region
      %s2335 = ssub.s32 %s12, 2
      // Predicated region
      $region53: #{tpu_custom_call.1} parent=51 // pred_check
        %p2336 = pneg %p177
      $region54: #{tpu_custom_call.1} parent=51 // pred_check_branch
        %2338 = sbr.rel (%p2336) target = $region56
      $region55: #{tpu_custom_call.1} parent=51 // pred_region
        %s2339 = smul.u32 32, %s18
        %p2340 = scmp.lt.s32.totalorder %s2339, 63
        %s2341 = scalar_select %p2340, %s2339, 63
        %s2342 = smul.addr %s2341, 8
        %s2343 = scalar_lea.vmem %s6, %s2342
      $region56: #{tpu_custom_call.1} parent=51 // pred_fallthru
        _
    $region52: #{tpu_custom_call.1} parent=5 // pred_fallthru
      _
  $region6: #{tpu_custom_call.1} parent=0 // loop_footer
    %s16 = sadd.s32 1, %s12
  $region7: #{tpu_custom_call.1} parent=0 // loop_footer_branch
    %11 = sbr.rel target = $region3
  $region8: #{tpu_custom_call.1} parent=0 // loop_exit
    _

</llo_original>
